<compile_context>
chip_gen: v5e
topology: v5e:2x2
jax: 0.10.0
libtpu: 0.0.40
codegen_flags: <defaults>
</compile_context>

<pallas_src>
import functools
import math

import jax
import jax.numpy as jnp
from jax import lax
from jax.experimental import pallas as pl
from jax.experimental.pallas import tpu as pltpu

F32 = jnp.float32
BF16 = jnp.bfloat16
BN_EPS = 1e-5
LN_EPS = 1e-12
INPUT_DIM = 2048           # cfg.IMGF.input_dim (channels coming out of layer4)
NUM_HEADS = 8              # cfg.IMGF.num_attention_heads (2048 % 8 == 0)
INTERMEDIATE_SIZE = 3072   # cfg.IMGF.intermediate_size (BERT-base style)
VMEM_LIMIT = 48 * 1024 * 1024   # explicit cap; peak live set ~30 MiB, fits v7x's 64 MiB


def _pick_tiles(m, n):
    """M/N tiles only (K is never tiled in this network, max K = 4608).

    tm: full M when small (BERT / layer3/4 / head), else 512 (ragged last tile
    handled by the pipeline). tn: full N, except N >= 1024 uses two lane-dense
    tiles so v7x's two TensorCores each stream a disjoint half of the weights
    (costs one extra ~0.35us step on single-core chips)."""
    tm = m if m <= 512 else 512
    tn = n
    if n >= 1024 and (n // 2) % 128 == 0:
        tn = n // 2
    return tm, tn


# --------------------------------------------------------------------------
# Pallas kernels
# --------------------------------------------------------------------------

def _mm_kernel(*refs, act, has_res, fuse_ln):
    """o = epilogue((a @ b) + shift [+ residual]); single K step (no acc scratch).

    epilogue = relu | gelu | (BERT LayerNorm over the full row when fuse_ln)."""
    a_ref, w_ref, t_ref = refs[0], refs[1], refs[2]
    idx = 3
    r_ref = None
    if has_res:
        r_ref = refs[idx]; idx += 1
    g_ref = be_ref = None
    if fuse_ln:
        g_ref, be_ref = refs[idx], refs[idx + 1]; idx += 2
    o_ref = refs[idx]

    y = jnp.dot(a_ref[...], w_ref[...], preferred_element_type=jnp.float32)
    y = y + t_ref[...]
    if has_res:
        y = y + r_ref[...].astype(jnp.float32)
    if act == "relu":
        y = jnp.maximum(y, 0.0)
    elif act == "gelu":
        # TODO(synk): tanh-approx GELU fused on the EUP (reference uses exact
        # erf GELU; erf has no guaranteed Mosaic lowering). Max dev ~1e-3.
        y = 0.5 * y * (1.0 + jnp.tanh(0.7978845608028654 *
                                      (y + 0.044715 * y * y * y)))
    if fuse_ln:
        # BERTLayerNorm (TF style, eps inside the sqrt) over the full row.
        u = jnp.mean(y, axis=-1, keepdims=True)
        v = jnp.mean(jnp.square(y - u), axis=-1, keepdims=True)
        y = (y - u) / jnp.sqrt(v + LN_EPS)
        y = g_ref[...] * y + be_ref[...]
    o_ref[...] = y.astype(o_ref.dtype)


def matmul_affine(a, w, shift, *, act="none", residual=None, ln=None,
                  out_dtype=F32):
    """(M,K)@(K,N) on the MXU in bf16 with f32 accumulation and a fused
    shift (+residual, +activation / +LayerNorm) epilogue.

    K is never tiled (single reduction step per output tile); M/N tiles per
    `_pick_tiles`. Grid is (N tiles, M tiles) so each weight block is DMA'd
    exactly once. Ragged M tiles are handled by the pipeline (OOB writes
    masked). `ln=(gamma, beta)` forces a full-row N tile."""
    m, k = a.shape
    kw_, n = w.shape
    assert kw_ == k
    tm, tn = _pick_tiles(m, n)
    fuse_ln = ln is not None
    if fuse_ln:
        tn = n                         # LayerNorm needs the full row in one tile
    a = a.astype(BF16)

    in_specs = [pl.BlockSpec((tm, k), lambda j, i: (i, 0)),
                pl.BlockSpec((k, tn), lambda j, i: (0, j)),
                pl.BlockSpec((1, tn), lambda j, i: (0, j))]
    args = [a, w, shift]
    has_res = residual is not None
    if has_res:
        in_specs.append(pl.BlockSpec((tm, tn), lambda j, i: (i, j)))
        args.append(residual)
    if fuse_ln:
        gamma, beta = ln
        in_specs.append(pl.BlockSpec((1, tn), lambda j, i: (0, j)))
        in_specs.append(pl.BlockSpec((1, tn), lambda j, i: (0, j)))
        args.extend([gamma.reshape(1, n), beta.reshape(1, n)])

    kernel = functools.partial(_mm_kernel, act=act, has_res=has_res,
                               fuse_ln=fuse_ln)
    return pl.pallas_call(
        kernel,
        out_shape=jax.ShapeDtypeStruct((m, n), out_dtype),
        grid_spec=pltpu.PrefetchScalarGridSpec(
            num_scalar_prefetch=0,
            grid=(n // tn, pl.cdiv(m, tm)),
            in_specs=in_specs,
            out_specs=pl.BlockSpec((tm, tn), lambda j, i: (i, j)),
        ),
        compiler_params=pltpu.CompilerParams(
            dimension_semantics=("parallel", "parallel"),
            vmem_limit_bytes=VMEM_LIMIT),
    )(*args)


def _conv3x3s1_kernel(x_ref, w_ref, t_ref, o_ref, *, offs, m_rows, chunk):
    """Fused 3x3/stride-1 conv + BN + ReLU for one (cout-tile, batch).

    x_ref holds the whole padded image flattened over (H, W); each of the 9 taps
    is a row-shifted slice of it, accumulated with 9 matmuls (no im2col in HBM).
    `chunk` is sized so the live f32 accumulator stays <= 128 KB (no vreg
    spills). BN scale is pre-folded into the weights; only the shift remains."""
    sh = t_ref[...]
    for r0 in range(0, m_rows, chunk):
        rows = min(chunk, m_rows - r0)
        acc = jnp.dot(x_ref[0, pl.ds(offs[0] + r0, rows), :], w_ref[0],
                      preferred_element_type=jnp.float32)
        for tap in range(1, 9):
            acc = acc + jnp.dot(x_ref[0, pl.ds(offs[tap] + r0, rows), :],
                                w_ref[tap], preferred_element_type=jnp.float32)
        o_ref[0, pl.ds(r0, rows), :] = jnp.maximum(acc + sh, 0.0).astype(o_ref.dtype)


@jax.jit
def conv3x3_s1_bn_relu(x, p):
    """3x3 / stride-1 / pad-1 Conv2d + eval-mode BN + ReLU (NHWC, bf16 in/out)."""
    b, h, w, cin = x.shape
    cout = p["wt"].shape[-1]
    wp = w + 2
    # H padded by (1, 2) so the row-shifted taps never read past the buffer.
    xp = jnp.pad(x, ((0, 0), (1, 2), (1, 1), (0, 0)))
    n_in_rows = (h + 3) * wp
    xf = xp.reshape(b, n_in_rows, cin)
    m_rows = h * wp
    offs = tuple(dy * wp + dx for dy in range(3) for dx in range(3))
    tn = cout if cout <= 256 else 256
    # keep the live accumulator at <= 128 KB (32 vregs): 512@tn=64, 256@128, 128@256
    chunk = max(64, (128 * 1024) // (tn * 4))
    kernel = functools.partial(_conv3x3s1_kernel, offs=offs, m_rows=m_rows,
                               chunk=chunk)
    out = pl.pallas_call(
        kernel,
        out_shape=jax.ShapeDtypeStruct((b, m_rows, cout), BF16),
        grid_spec=pltpu.PrefetchScalarGridSpec(
            num_scalar_prefetch=0,
            # cout tiles lead: weights fetched once per tile, and v7x's two TCs
            # split disjoint weight halves instead of duplicating the DMA.
            grid=(cout // tn, b),
            in_specs=[pl.BlockSpec((1, n_in_rows, cin), lambda j, i: (i, 0, 0)),
                      pl.BlockSpec((9, cin, tn), lambda j, i: (0, 0, j)),
                      pl.BlockSpec((1, tn), lambda j, i: (0, j))],
            out_specs=pl.BlockSpec((1, m_rows, tn), lambda j, i: (i, 0, j)),
        ),
        compiler_params=pltpu.CompilerParams(
            dimension_semantics=("parallel", "parallel"),
            vmem_limit_bytes=VMEM_LIMIT),
    )(xf, p["wt"], p["shift"])
    # TODO(synk): this width crop is an extra activation round-trip through HBM;
    # the following 1x1 conv could consume the padded-width layout instead.
    return out.reshape(b, h, wp, cout)[:, :, :w, :]


def _self_attn_kernel(x_ref, m_ref, o_ref, *, scale):
    """BERT self-attn for one (batch, head): softmax(x x^T/sqrt(dh)+mask) @ x."""
    x = x_ref[0, 0]                                            # (S, dh) bf16
    s = lax.dot_general(x, x, (((1,), (1,)), ((), ())),
                        preferred_element_type=jnp.float32) * scale
    s = s + m_ref[0, 0]                                        # (1, S) broadcast
    s = s - jnp.max(s, axis=-1, keepdims=True)
    p = jnp.exp(s)
    p = p / jnp.sum(p, axis=-1, keepdims=True)
    o_ref[0, 0] = jnp.dot(p.astype(x.dtype), x,
                          preferred_element_type=jnp.float32).astype(o_ref.dtype)


@jax.jit
def bert_self_attention(x_heads, ext_mask):
    b, h, s, dh = x_heads.shape
    return pl.pallas_call(
        functools.partial(_self_attn_kernel, scale=1.0 / math.sqrt(dh)),
        out_shape=jax.ShapeDtypeStruct((b, h, s, dh), BF16),
        grid=(b, h),
        in_specs=[pl.BlockSpec((1, 1, s, dh), lambda i, j: (i, j, 0, 0)),
                  pl.BlockSpec((1, 1, 1, s), lambda i, j: (i, 0, 0, 0))],
        out_specs=pl.BlockSpec((1, 1, s, dh), lambda i, j: (i, j, 0, 0)),
        compiler_params=pltpu.CompilerParams(
            dimension_semantics=("parallel", "parallel"),
            vmem_limit_bytes=VMEM_LIMIT),
    )(x_heads, ext_mask)


def _avgpool_kernel(x_ref, o_ref):
    o_ref[...] = jnp.mean(x_ref[...], axis=1)


@jax.jit
def adaptive_avgpool(x_bsc):
    """AdaptiveAvgPool2d((1,1)) on [B, H*W, C] == mean over the spatial axis."""
    b, s, c = x_bsc.shape
    return pl.pallas_call(
        _avgpool_kernel,
        out_shape=jax.ShapeDtypeStruct((b, c), F32),
        grid=(1,),
        in_specs=[pl.BlockSpec((b, s, c), lambda i: (0, 0, 0))],
        out_specs=pl.BlockSpec((b, c), lambda i: (0, 0)),
    )(x_bsc)


def _affine_kernel(x_ref, s_ref, t_ref, o_ref):
    o_ref[...] = x_ref[...] * s_ref[...] + t_ref[...]


@jax.jit
def batchnorm1d(x, gamma, beta, run_mean, run_var):
    """nn.BatchNorm1d in inference mode (running statistics)."""
    s = gamma / jnp.sqrt(run_var + BN_EPS)
    t = beta - run_mean * s
    m, d = x.shape
    return pl.pallas_call(
        _affine_kernel,
        out_shape=jax.ShapeDtypeStruct((m, d), F32),
        grid=(1,),
        in_specs=[pl.BlockSpec((m, d), lambda i: (0, 0)),
                  pl.BlockSpec((1, d), lambda i: (0, 0)),
                  pl.BlockSpec((1, d), lambda i: (0, 0))],
        out_specs=pl.BlockSpec((m, d), lambda i: (0, 0)),
    )(x, s.reshape(1, d), t.reshape(1, d))


# --------------------------------------------------------------------------
# Conv / linear wrappers (glue in JAX, hot path in Pallas)
# --------------------------------------------------------------------------

@functools.partial(jax.jit, static_argnames=("kh", "kw", "stride", "padding", "act"))
def conv_bn(x, p, *, kh, kw, stride, padding, act="none", residual=None):
    """Conv2d (no bias) + eval-mode BN [+ residual] [+ ReLU] via the general
    Pallas matmul (BN scale pre-folded into the weights). 1x1 convs are a pure
    reshape (no padding, no extra passes)."""
    b, h, w_, cin = x.shape
    cout = p["shift"].shape[1]
    if kh == 1 and kw == 1 and padding == 0:
        xs = x if stride == 1 else x[:, ::stride, ::stride, :]
        ho, wo = xs.shape[1], xs.shape[2]
        patches = xs.reshape(b * ho * wo, cin)
    else:
        # TODO(synk): the 7x7/s2 stem conv and the three 3x3/s2 convs still
        # materialize im2col patches in HBM (all other 3x3 convs use the fused
        # tap kernel above).
        xp = jnp.pad(x, ((0, 0), (padding, padding), (padding, padding), (0, 0)))
        ho = (h + 2 * padding - kh) // stride + 1
        wo = (w_ + 2 * padding - kw) // stride + 1
        cols = []
        for dy in range(kh):
            for dx in range(kw):
                cols.append(xp[:, dy:dy + stride * (ho - 1) + 1:stride,
                               dx:dx + stride * (wo - 1) + 1:stride, :])
        patches = jnp.stack(cols, axis=3).reshape(b * ho * wo, kh * kw * cin)
    res2 = None if residual is None else residual.reshape(b * ho * wo, cout)
    y = matmul_affine(patches, p["w2"], p["shift"], act=act, residual=res2,
                      out_dtype=BF16)
    return y.reshape(b, ho, wo, cout)


@functools.partial(jax.jit, static_argnames=("act", "out_dtype"))
def linear(x, p, act="none", out_dtype=F32):
    return matmul_affine(x, p["w2"], p["shift"], act=act, out_dtype=out_dtype)


@jax.jit
def linear_ln_res(x, p, residual, gamma, beta):
    """dense(x) -> dropout(identity) -> BERTLayerNorm(. + residual), fused."""
    return matmul_affine(x, p["w2"], p["shift"], residual=residual,
                         ln=(gamma, beta), out_dtype=F32)


# --------------------------------------------------------------------------
# Deterministic synthetic parameters (module __init__ shapes, not a checkpoint)
# --------------------------------------------------------------------------

_PARAM_KEY = jax.random.PRNGKey(0)
_param_counter = [0]


def _next_key():
    _param_counter[0] += 1
    return jax.random.fold_in(_PARAM_KEY, _param_counter[0])


def conv_bn_params(kh, kw, cin, cout, *, layout="matmul"):
    std = math.sqrt(1.0 / (kh * kw * cin))
    w = jax.random.normal(_next_key(), (kh, kw, cin, cout), F32) * std
    gamma, beta = jnp.ones((cout,), F32), jnp.zeros((cout,), F32)
    rm, rv = jnp.zeros((cout,), F32), jnp.ones((cout,), F32)
    scale = gamma / jnp.sqrt(rv + BN_EPS)       # eval-mode BN folded to scale/shift
    shift = beta - rm * scale
    w = w * scale                               # fold BN scale into the conv weights
    p = {"shift": shift.reshape(1, cout)}
    if layout == "taps":                        # fused 3x3/stride-1 kernel
        p["wt"] = w.reshape(kh * kw, cin, cout).astype(BF16)
    else:                                       # general matmul, bf16 (K, N)
        p["w2"] = w.reshape(kh * kw * cin, cout).astype(BF16)
    return p


def linear_params(cin, cout, std=0.02):
    w = jax.random.normal(_next_key(), (cin, cout), F32) * std
    return {"w2": w.astype(BF16), "shift": jnp.zeros((1, cout), F32)}


def make_bottleneck(inplanes, planes, stride, downsample):
    p = {"conv1": conv_bn_params(1, 1, inplanes, planes),
         "conv2": conv_bn_params(3, 3, planes, planes,
                                 layout="taps" if stride == 1 else "matmul"),
         "conv3": conv_bn_params(1, 1, planes, planes * 4),
         "stride": stride}
    if downsample:
        p["down"] = conv_bn_params(1, 1, inplanes, planes * 4)
    return p


def make_layer(inplanes, planes, blocks, stride):
    layer = [make_bottleneck(inplanes, planes, stride, True)]
    inplanes = planes * 4
    for _ in range(blocks - 1):
        layer.append(make_bottleneck(inplanes, planes, 1, False))
    return layer, inplanes


def make_params():
    resnet = {"conv1": conv_bn_params(7, 7, 3, 64)}
    inplanes = 64
    resnet["layer1"], inplanes = make_layer(inplanes, 64, 3, 1)    # 3 bottlenecks
    resnet["layer2"], inplanes = make_layer(inplanes, 128, 4, 2)   # 4
    resnet["layer3"], inplanes = make_layer(inplanes, 256, 23, 2)  # 23
    resnet["layer4"], inplanes = make_layer(inplanes, 512, 3, 2)   # 3
    bert = {"xtrans": linear_params(INPUT_DIM, INPUT_DIM),
            "self_out": linear_params(INPUT_DIM, INPUT_DIM),
            "ln1_g": jnp.ones((INPUT_DIM,), F32),
            "ln1_b": jnp.zeros((INPUT_DIM,), F32),
            "inter": linear_params(INPUT_DIM, INTERMEDIATE_SIZE),
            "out": linear_params(INTERMEDIATE_SIZE, INPUT_DIM),
            "ln2_g": jnp.ones((INPUT_DIM,), F32),
            "ln2_b": jnp.zeros((INPUT_DIM,), F32)}
    head = {"fc": linear_params(2048, 1024),
            "bn_g": jnp.ones((2048,), F32), "bn_b": jnp.zeros((2048,), F32),
            "bn_rm": jnp.zeros((2048,), F32), "bn_rv": jnp.ones((2048,), F32)}
    # NOTE: self.encoder (EncoderBlock) is constructed in define_module but never
    # used in Resnet101.forward, so it is intentionally omitted here.
    return {"resnet": resnet, "bert": bert, "head": head}


# --------------------------------------------------------------------------
# Forward pass
# --------------------------------------------------------------------------

def bottleneck_forward(x, p):
    out = conv_bn(x, p["conv1"], kh=1, kw=1, stride=1, padding=0, act="relu")
    if p["stride"] == 1:
        out = conv3x3_s1_bn_relu(out, p["conv2"])
    else:
        out = conv_bn(out, p["conv2"], kh=3, kw=3, stride=p["stride"], padding=1,
                      act="relu")
    if "down" in p:
        identity = conv_bn(x, p["down"], kh=1, kw=1, stride=p["stride"], padding=0,
                           act="none")
    else:
        identity = x
    # conv3 + bn3; out += identity; relu  (residual + relu fused in the epilogue)
    return conv_bn(out, p["conv3"], kh=1, kw=1, stride=1, padding=0, act="relu",
                   residual=identity)


def bert_layer_forward(x, ext_mask, p):
    b, s, d = x.shape
    dh = d // NUM_HEADS
    x2 = x.reshape(b * s, d)
    # BERTSelfAttention (dropout == identity); Q = K = V = xtrans(x)
    mixed = linear(x2, p["xtrans"], out_dtype=BF16)
    x_heads = mixed.reshape(b, s, NUM_HEADS, dh).transpose(0, 2, 1, 3)
    ctx = bert_self_attention(x_heads, ext_mask)            # bf16
    ctx = ctx.transpose(0, 2, 1, 3).reshape(b * s, d)
    # BERTSelfOutput: dense + (x2 residual) + LayerNorm fused in the epilogue
    att_out = linear_ln_res(ctx, p["self_out"], x2, p["ln1_g"], p["ln1_b"])
    # BERTIntermediate (GELU fused into the matmul epilogue)
    inter = linear(att_out, p["inter"], act="gelu", out_dtype=BF16)
    # BERTOutput: dense + (att_out residual) + LayerNorm fused in the epilogue
    out = linear_ln_res(inter, p["out"], att_out, p["ln2_g"], p["ln2_b"])
    return out.reshape(b, s, d)


def resnet101_forward(x_nchw, params):
    b = x_nchw.shape[0]
    # F.interpolate(size=(244, 244), mode='bilinear', align_corners=False)
    x = jax.image.resize(x_nchw, (b, x_nchw.shape[1], 244, 244),
                         method="bilinear", antialias=False)
    x = jnp.transpose(x, (0, 2, 3, 1)).astype(BF16)   # NCHW -> NHWC, bf16 activations
    # conv1 + bn1 + relu
    x = conv_bn(x, params["resnet"]["conv1"], kh=7, kw=7, stride=2, padding=3,
                act="relu")
    # maxpool 3x3 / stride 2 / pad 1 (window max kept in JAX glue)
    x = lax.reduce_window(x, jnp.array(-jnp.inf, x.dtype), lax.max,
                          (1, 3, 3, 1), (1, 2, 2, 1),
                          ((0, 0), (1, 1), (1, 1), (0, 0)))
    for name in ("layer1", "layer2", "layer3", "layer4"):
        for blk in params["resnet"][name]:
            x = bottleneck_forward(x, blk)
    bb, hh, ww, cc = x.shape                          # (B, 8, 8, 2048)
    # att = x.view(B, C, H*W).transpose(1, 2) -> [B, H*W, C]
    att = x.reshape(bb, hh * ww, cc).astype(F32)
    # TransformerMapping
    # TODO(synk): TransformerMapping.forward calls self.mapping, which is never
    # defined in the reference __init__ (AttributeError in PyTorch); treated as
    # identity here.
    s = att.shape[1]
    attention_mask = jnp.ones((bb, s), F32)
    ext_mask = ((1.0 - attention_mask) * -10000.0).reshape(bb, 1, 1, s)
    att = bert_layer_forward(att, ext_mask, params["bert"])
    # att.transpose(1,2).view(B,C,H,W) -> AdaptiveAvgPool2d((1,1)) -> view(B, C)
    pooled = adaptive_avgpool(att)                    # [B, 2048]
    hbn = batchnorm1d(pooled, params["head"]["bn_g"], params["head"]["bn_b"],
                      params["head"]["bn_rm"], params["head"]["bn_rv"])
    return linear(hbn, params["head"]["fc"])          # [B, 1024]


if __name__ == "__main__":
    params = make_params()
    x = jax.random.normal(jax.random.PRNGKey(0), (2, 3, 16, 16), F32)
    out = resnet101_forward(x, params)
    out = jax.block_until_ready(out)
    assert out.shape == (2, 1024), out.shape
    assert bool(jnp.isfinite(out).all())
    print("KERNEL_OK")
</pallas_src>

<mosaic_0001>
module attributes {stable_mosaic.version = 11 : i64} {
  func.func @_mm_kernel(%arg0: i32, %arg1: i32, %arg2: memref<512x147xbf16, #tpu.memory_space<vmem>>, %arg3: memref<147x64xbf16, #tpu.memory_space<vmem>>, %arg4: memref<1x64xf32, #tpu.memory_space<vmem>>, %arg5: memref<512x64xbf16, #tpu.memory_space<vmem>>) attributes {dimension_semantics = [#tpu.dimension_semantics<parallel>, #tpu.dimension_semantics<parallel>], iteration_bounds = array<i64: 1, 59>, scalar_prefetch = 0 : i64, scratch_operands = 0 : i64, tpu.core_type = #tpu.core_type<tc>, window_params = [{transform_indices = @transform_0, window_bounds = array<i64: 512, 147>}, {transform_indices = @transform_1, window_bounds = array<i64: 147, 64>}, {transform_indices = @transform_2, window_bounds = array<i64: 1, 64>}, {transform_indices = @transform_3, window_bounds = array<i64: 512, 64>}]} {
    %c0 = arith.constant 0 : index
    %c0_0 = arith.constant 0 : index
    %0 = vector.load %arg2[%c0, %c0_0] : memref<512x147xbf16, #tpu.memory_space<vmem>>, vector<512x147xbf16>
    %c0_1 = arith.constant 0 : index
    %c0_2 = arith.constant 0 : index
    %1 = vector.load %arg3[%c0_1, %c0_2] : memref<147x64xbf16, #tpu.memory_space<vmem>>, vector<147x64xbf16>
    %cst = arith.constant dense<0.000000e+00> : vector<512x64xf32>
    %2 = tpu.matmul %0, %1, %cst {dimension_numbers = #tpu.dot_dimension_numbers<[1], [0], [0], [1], [0, 0, 1, 1], [], []>} : vector<512x147xbf16>, vector<147x64xbf16>, vector<512x64xf32> -> vector<512x64xf32>
    %c0_3 = arith.constant 0 : index
    %c0_4 = arith.constant 0 : index
    %3 = vector.load %arg4[%c0_3, %c0_4] : memref<1x64xf32, #tpu.memory_space<vmem>>, vector<1x64xf32>
    %4 = vector.broadcast %3 : vector<1x64xf32> to vector<512x64xf32>
    %5 = arith.addf %2, %4 : vector<512x64xf32>
    %cst_5 = arith.constant 0.000000e+00 : f32
    %6 = vector.broadcast %cst_5 : f32 to vector<512x64xf32>
    %7 = arith.maximumf %5, %6 : vector<512x64xf32>
    %8 = arith.truncf %7 : vector<512x64xf32> to vector<512x64xbf16>
    %c0_6 = arith.constant 0 : index
    %c0_7 = arith.constant 0 : index
    %9 = vector.load %arg5[%c0_6, %c0_7] : memref<512x64xbf16, #tpu.memory_space<vmem>>, vector<512x64xbf16>
    tpu.vector_store %arg5[%c0_6, %c0_7], %8 {strides = array<i32>} : memref<512x64xbf16, #tpu.memory_space<vmem>>, vector<512x64xbf16>,
    return
  }
  func.func @transform_0(%arg0: i32, %arg1: i32) -> (i32, i32) {
    %c0_i32 = arith.constant 0 : i32
    %c0_i32_0 = arith.constant 0 : i32
    return %arg1, %c0_i32 : i32, i32
  }
  func.func @transform_1(%arg0: i32, %arg1: i32) -> (i32, i32) {
    %c0_i32 = arith.constant 0 : i32
    %c0_i32_0 = arith.constant 0 : i32
    return %c0_i32, %arg0 : i32, i32
  }
  func.func @transform_2(%arg0: i32, %arg1: i32) -> (i32, i32) {
    %c0_i32 = arith.constant 0 : i32
    %c0_i32_0 = arith.constant 0 : i32
    return %c0_i32, %arg0 : i32, i32
  }
  func.func @transform_3(%arg0: i32, %arg1: i32) -> (i32, i32) {
    %c0_i32 = arith.constant 0 : i32
    return %arg1, %arg0 : i32, i32
  }
}

</mosaic_0001>

<llo_original>
// kernel: conv_bn.1
$region0: #{conv_bn.1}
  #allocation0 [shape = 'u32[]', space=smem, size = 0x4, offset = 0x4, fixed_abs, tag = 'smem constant byte address 0x4 - core index']
  #allocation1 [shape = 'u32[72,128]{1,0:T(1,128)}', space=vmem, size = 0x9000, scoped, tag = 'internal scratch']
  %s0 = inlined_call_operand.vmem [shape: bf16[29768,147], index: 0, kind: input, shape index: {}]
  %s1 = inlined_call_operand.vmem [shape: bf16[147,64], index: 1, kind: input, shape index: {}]
  %s2 = inlined_call_operand.vmem [shape: f32[1,64], index: 2, kind: input, shape index: {}]
  %s3 = inlined_call_operand.vmem [shape: bf16[29768,64], index: 3, kind: output, shape index: {}]
  %s4 = sld [smem:[#allocation0]]
  $region89: #{conv_bn.1} parent=0
    _
  %s6 = ssub.s32 1, %s4
  %s7 = scalar_select 0, %s6, %s4
  $region1: #{conv_bn.1} parent=0
    #allocation2 [shape = 'u8[262144]{0}', space=vmem, size = 0x40000, scoped, tag = 'output window, operand 0']
    loop: start=0, step=1, limit=61
    $region2: #{conv_bn.1} parent=1 // loop_pre_header
      _
    $region3: #{conv_bn.1} parent=1 // loop_header
      %s9 = sphi 0, %s13
      %p10 = scmp.ge.s32.totalorder %s9, 61
      %s16 = sphi 0, %s28
      %s17 = sphi 0, %s24
      %s18 = sphi 0, %s16
      %s19 = sphi 0, %s17
      %s20 = sphi 0, %s18
      %s21 = sphi 0, %s19
      %s31 = sphi 0, %s33
      %s34 = sphi 0, %s31
      %s35 = sphi 0, %s34
      %s51 = sphi 0, %s35
      %s57 = sphi 0, %s59
      %s60 = sphi 0, %s57
      %s61 = sphi 0, %s60
      %s77 = sphi 0, %s61
      %s83 = sphi 0, %s85
      %s86 = sphi 0, %s83
      %s87 = sphi 0, %s86
      %s103 = sphi 0, %s87
      %s111 = sphi 0, %s113
      %s114 = sphi 0, %s111
      %s115 = sphi 0, %s114
      %s131 = sphi 0, %s115
    $region4: #{conv_bn.1} parent=1 // loop_header_branch
      %12 = sbr.rel (%p10) target = $region8
    $region5: #{conv_bn.1} parent=1 // loop_body
      %s14 = ssub.s32 %s9, 1
      %s15 = ssub.s32 %s9, 2
      %s22 = sadd.s32 1, %s17
      %p23 = scmp.ge.s32.totalorder %s22, 59
      %s24 = scalar_select %p23, 0, %s22
      %s25 = sadd.s32 1, %s16
      %s26 = scalar_select %p23, %s25, %s16
      %p27 = scmp.ge.s32.totalorder %s26, 1
      %s28 = scalar_select %p27, 0, %s26
      %s29 = ssub.s32 %s17, %s24
      %p30 = scmp.eq.s32.totalorder %s29, 0
      %s32 = sadd.s32 %s31, 1
      %s33 = scalar_select %p30, %s31, %s32
      %p36 = pneg %p30
      %p37 = scmp.eq.s32.totalorder %s9, 58
      %p38 = por %p36, %p37
      %p39 = scmp.ne.s32.totalorder %s31, %s34
      %p40 = scmp.eq.s32.totalorder %s9, 0
      %p41 = por %p39, %p40
      %p42 = scmp.ne.s32.totalorder %s31, %s34
      %p43 = scmp.eq.s32.totalorder %s14, 58
      %p44 = por %p42, %p43
      %p45 = scmp.ne.s32.totalorder %s34, %s35
      %p46 = scmp.eq.s32.totalorder %s14, 0
      %p47 = por %p45, %p46
      %p48 = scmp.ne.s32.totalorder %s34, %s35
      %p49 = scmp.eq.s32.totalorder %s15, 58
      %p50 = por %p48, %p49
      %p52 = scmp.ne.s32.totalorder %s35, %s51
      %p53 = scmp.eq.s32.totalorder %s15, 0
      %p54 = por %p52, %p53
      %s55 = ssub.s32 %s16, %s28
      %p56 = scmp.eq.s32.totalorder %s55, 0
      %s58 = sadd.s32 %s57, 1
      %s59 = scalar_select %p56, %s57, %s58
      %p62 = pneg %p56
      %p63 = scmp.eq.s32.totalorder %s9, 58
      %p64 = por %p62, %p63
      %p65 = scmp.ne.s32.totalorder %s57, %s60
      %p66 = scmp.eq.s32.totalorder %s9, 0
      %p67 = por %p65, %p66
      %p68 = scmp.ne.s32.totalorder %s57, %s60
      %p69 = scmp.eq.s32.totalorder %s14, 58
      %p70 = por %p68, %p69
      %p71 = scmp.ne.s32.totalorder %s60, %s61
      %p72 = scmp.eq.s32.totalorder %s14, 0
      %p73 = por %p71, %p72
      %p74 = scmp.ne.s32.totalorder %s60, %s61
      %p75 = scmp.eq.s32.totalorder %s15, 58
      %p76 = por %p74, %p75
      %p78 = scmp.ne.s32.totalorder %s61, %s77
      %p79 = scmp.eq.s32.totalorder %s15, 0
      %p80 = por %p78, %p79
      %s81 = ssub.s32 %s16, %s28
      %p82 = scmp.eq.s32.totalorder %s81, 0
      %s84 = sadd.s32 %s83, 1
      %s85 = scalar_select %p82, %s83, %s84
      %p88 = pneg %p82
      %p89 = scmp.eq.s32.totalorder %s9, 58
      %p90 = por %p88, %p89
      %p91 = scmp.ne.s32.totalorder %s83, %s86
      %p92 = scmp.eq.s32.totalorder %s9, 0
      %p93 = por %p91, %p92
      %p94 = scmp.ne.s32.totalorder %s83, %s86
      %p95 = scmp.eq.s32.totalorder %s14, 58
      %p96 = por %p94, %p95
      %p97 = scmp.ne.s32.totalorder %s86, %s87
      %p98 = scmp.eq.s32.totalorder %s14, 0
      %p99 = por %p97, %p98
      %p100 = scmp.ne.s32.totalorder %s86, %s87
      %p101 = scmp.eq.s32.totalorder %s15, 58
      %p102 = por %p100, %p101
      %p104 = scmp.ne.s32.totalorder %s87, %s103
      %p105 = scmp.eq.s32.totalorder %s15, 0
      %p106 = por %p104, %p105
      %s107 = ssub.s32 %s17, %s24
      %s108 = ssub.s32 %s16, %s28
      %s109 = sor.u32 %s107, %s108
      %p110 = scmp.eq.s32.totalorder %s109, 0
      %s112 = sadd.s32 %s111, 1
      %s113 = scalar_select %p110, %s111, %s112
      %p116 = pneg %p110
      %p117 = scmp.eq.s32.totalorder %s9, 58
      %p118 = por %p116, %p117
      %p119 = scmp.ne.s32.totalorder %s111, %s114
      %p120 = scmp.eq.s32.totalorder %s9, 0
      %p121 = por %p119, %p120
      %p122 = scmp.ne.s32.totalorder %s111, %s114
      %p123 = scmp.eq.s32.totalorder %s14, 58
      %p124 = por %p122, %p123
      %p125 = scmp.ne.s32.totalorder %s114, %s115
      %p126 = scmp.eq.s32.totalorder %s14, 0
      %p127 = por %p125, %p126
      %p128 = scmp.ne.s32.totalorder %s114, %s115
      %p129 = scmp.eq.s32.totalorder %s15, 58
      %p130 = por %p128, %p129
      %p132 = scmp.ne.s32.totalorder %s115, %s131
      %p133 = scmp.eq.s32.totalorder %s15, 0
      %p134 = por %p132, %p133
      %p135 = scmp.le.s32.totalorder 1, %s9
      %p136 = scmp.lt.s32.totalorder %s9, 60
      %p137 = pnand %p135, %p136
      %p138 = pneg %p137
      // Predicated region
      $region9: #{conv_bn.1} parent=5 // pred_check
        _
      $region10: #{conv_bn.1} parent=5 // pred_check_branch
        %140 = sbr.rel (%p137) target = $region12
      $region11: #{conv_bn.1} parent=5 // pred_region
        %s141 = ssub.s32 %s9, 1
        // Predicated region
        $region13: #{conv_bn.1} parent=11 // pred_check
          %p142 = pneg %p73
        $region14: #{conv_bn.1} parent=11 // pred_check_branch
          %144 = sbr.rel (%p142) target = $region16
        $region15: #{conv_bn.1} parent=11 // pred_region
          %p145 = scmp.lt.s32.totalorder %s18, 0
          %s146 = scalar_select %p145, %s18, 0
          %s147 = smul.addr %s146, 4
          %s148 = scalar_lea.vmem %s1, %s147
        $region16: #{conv_bn.1} parent=11 // pred_fallthru
          _
        // Predicated region
        $region17: #{conv_bn.1} parent=11 // pred_check
          %p149 = pneg %p99
        $region18: #{conv_bn.1} parent=11 // pred_check_branch
          %151 = sbr.rel (%p149) target = $region20
        $region19: #{conv_bn.1} parent=11 // pred_region
          %p152 = scmp.lt.s32.totalorder %s18, 0
          %s153 = scalar_select %p152, %s18, 0
          %s154 = scalar_lea.vmem %s2, %s153
        $region20: #{conv_bn.1} parent=11 // pred_fallthru
          _
      $region12: #{conv_bn.1} parent=5 // pred_fallthru
        _
      %p155 = scmp.lt.s32.totalorder %s9, 59
      // Predicated region
      $region21: #{conv_bn.1} parent=5 // pred_check
        %p156 = pneg %p155
      $region22: #{conv_bn.1} parent=5 // pred_check_branch
        %158 = sbr.rel (%p156) target = $region24
      $region23: #{conv_bn.1} parent=5 // pred_region
        // Predicated region
        $region25: #{conv_bn.1} parent=23 // pred_check
          %p159 = pneg %p41
        $region26: #{conv_bn.1} parent=23 // pred_check_branch
          %161 = sbr.rel (%p159) target = $region28
        $region27: #{conv_bn.1} parent=23 // pred_region
          %s162 = smul.u32 64, %s17
          %s163 = ssub.s32 3721, %s162
          %p164 = scmp.lt.s32.totalorder %s163, 64
          %s165 = scalar_select %p164, %s163, 64
          %s166 = smul.u32 4, %s165
          %s167 = smul.u32 %s166, 2
          %p168 = scmp.lt.s32.totalorder %s162, 3720
          %s169 = scalar_select %p168, %s162, 3720
          %s170 = smul.addr %s169, 2
          %s171 = smul.addr %s170, 4
          %s172 = scalar_lea.vmem %s0, %s171
          %s173 = smul.u32 64, %s17
          %s174 = ssub.s32 3721, %s173
          %p175 = scmp.lt.s32.totalorder %s174, 64
          %s176 = scalar_select %p175, %s174, 64
          %s177 = smul.u32 4, %s176
          %s178 = smul.u32 %s177, 2
        $region28: #{conv_bn.1} parent=23 // pred_fallthru
          _
      $region24: #{conv_bn.1} parent=5 // pred_fallthru
        _
      %p179 = scmp.le.s32.totalorder 1, %s9
      %p180 = scmp.lt.s32.totalorder %s9, 60
      %p181 = pnand %p179, %p180
      %p182 = pneg %p181
      // Predicated region
      $region29: #{conv_bn.1} parent=5 // pred_check
        _
      $region30: #{conv_bn.1} parent=5 // pred_check_branch
        %184 = sbr.rel (%p181) target = $region32
      $region31: #{conv_bn.1} parent=5 // pred_region
        %s185 = ssub.s32 %s9, 1
        %s186 = smul.u32 64, %s19
        %s187 = ssub.s32 3721, %s186
        %p188 = scmp.lt.s32.totalorder %s187, 64
        %s189 = scalar_select %p188, %s187, 64
        %s190 = smul.u32 4, %s189
        %s191 = smul.u32 %s190, 2
        %p192 = scmp.lt.s32.totalorder %s186, 3720
        %s193 = scalar_select %p192, %s186, 3720
        %s194 = smul.addr %s193, 2
        %s195 = smul.addr %s194, 4
        %s196 = scalar_lea.vmem %s0, %s195
        %p197 = pneg %p47
        %p198 = pneg %p44
        %p199 = scmp.lt.s32.totalorder %s18, 0
        %s200 = scalar_select %p199, %s18, 0
        %s201 = smul.addr %s200, 4
        %s202 = scalar_lea.vmem %s1, %s201
        %p203 = pneg %p73
        %p204 = pneg %p70
        %p205 = scmp.lt.s32.totalorder %s18, 0
        %s206 = scalar_select %p205, %s18, 0
        %s207 = scalar_lea.vmem %s2, %s206
        %p208 = pneg %p99
        %p209 = pneg %p96
        %p210 = pneg %p127
        %p211 = pneg %p124
        %s212 = sand.u32 %s114, 1
        %s213 = sand.u32 %s114, 1
        %s214 = smul.addr %s213, 256
        %s215 = scalar_lea.vmem [#allocation2], %s214
        %s216 = smul.u32 64, %s19
        %s217 = ssub.s32 3721, %s216
        %p218 = scmp.lt.s32.totalorder %s217, 64
        %s219 = scalar_select %p218, %s217, 64
        %s220 = smul.u32 4, %s219
        %s221 = smul.u32 %s220, 2
        %p222 = scmp.lt.s32.totalorder %s216, 3720
        %s223 = scalar_select %p222, %s216, 3720
        %s224 = smul.addr %s223, 2
        %s225 = smul.addr %s224, 4
        %s226 = scalar_lea.vmem %s0, %s225
        %s227 = smul.u32 64, %s19
        %s228 = ssub.s32 3721, %s227
        %p229 = scmp.lt.s32.totalorder %s228, 64
        %s230 = scalar_select %p229, %s228, 64
        %s231 = smul.u32 4, %s230
        %s232 = smul.u32 %s231, 2
        %p233 = scmp.lt.s32.totalorder %s18, 0
        %s234 = scalar_select %p233, %s18, 0
        %s235 = smul.addr %s234, 4
        %s236 = scalar_lea.vmem %s1, %s235
        %p237 = scmp.lt.s32.totalorder %s18, 0
        %s238 = scalar_select %p237, %s18, 0
        %s239 = scalar_lea.vmem %s2, %s238
        %s240 = smul.u32 64, %s19
        %s241 = ssub.s32 3721, %s240
        %p242 = scmp.lt.s32.totalorder %s241, 64
        %s243 = scalar_select %p242, %s241, 64
        %s244 = smul.u32 4, %s243
        %v246 = vld [vmem:[%s226] sm:$0xff]
        %v247 = vld [vmem:[%s226 + $0x8] sm:$0xff]
        %v248 = vld [vmem:[%s226 + $0x10] sm:$0xff]
        %v249 = vld [vmem:[%s226 + $0x18] sm:$0xff]
        %v250 = vld [vmem:[%s226 + $0x20] sm:$0xff]
        %v251 = vld [vmem:[%s226 + $0x28] sm:$0xff]
        %v252 = vld [vmem:[%s226 + $0x30] sm:$0xff]
        %v253 = vld [vmem:[%s226 + $0x38] sm:$0xff]
        %v254 = vld [vmem:[%s226 + $0x40] sm:$0xff]
        %v255 = vld [vmem:[%s226 + $0x48] sm:$0xff]
        %v256 = vld [vmem:[%s226 + $0x50] sm:$0xff]
        %v257 = vld [vmem:[%s226 + $0x58] sm:$0xff]
        %v258 = vld [vmem:[%s226 + $0x60] sm:$0xff]
        %v259 = vld [vmem:[%s226 + $0x68] sm:$0xff]
        %v260 = vld [vmem:[%s226 + $0x70] sm:$0xff]
        %v261 = vld [vmem:[%s226 + $0x78] sm:$0xff]
        %v262 = vld [vmem:[%s226 + $0x80] sm:$0xff]
        %v263 = vld [vmem:[%s226 + $0x88] sm:$0xff]
        %v264 = vld [vmem:[%s226 + $0x90] sm:$0xff]
        %v265 = vld [vmem:[%s226 + $0x98] sm:$0xff]
        %v266 = vld [vmem:[%s226 + $0xa0] sm:$0xff]
        %v267 = vld [vmem:[%s226 + $0xa8] sm:$0xff]
        %v268 = vld [vmem:[%s226 + $0xb0] sm:$0xff]
        %v269 = vld [vmem:[%s226 + $0xb8] sm:$0xff]
        %v270 = vld [vmem:[%s226 + $0xc0] sm:$0xff]
        %v271 = vld [vmem:[%s226 + $0xc8] sm:$0xff]
        %v272 = vld [vmem:[%s226 + $0xd0] sm:$0xff]
        %v273 = vld [vmem:[%s226 + $0xd8] sm:$0xff]
        %v274 = vld [vmem:[%s226 + $0xe0] sm:$0xff]
        %v275 = vld [vmem:[%s226 + $0xe8] sm:$0xff]
        %v276 = vld [vmem:[%s226 + $0xf0] sm:$0xff]
        %v277 = vld [vmem:[%s226 + $0xf8] sm:$0xff]
        %v278 = vld [vmem:[%s226 + $0x100] sm:$0xff]
        %v279 = vld [vmem:[%s226 + $0x108] sm:$0xff]
        %v280 = vld [vmem:[%s226 + $0x110] sm:$0xff]
        %v281 = vld [vmem:[%s226 + $0x118] sm:$0xff]
        %v282 = vld [vmem:[%s226 + $0x120] sm:$0xff]
        %v283 = vld [vmem:[%s226 + $0x128] sm:$0xff]
        %v284 = vld [vmem:[%s226 + $0x130] sm:$0xff]
        %v285 = vld [vmem:[%s226 + $0x138] sm:$0xff]
        %v286 = vld [vmem:[%s226 + $0x140] sm:$0xff]
        %v287 = vld [vmem:[%s226 + $0x148] sm:$0xff]
        %v288 = vld [vmem:[%s226 + $0x150] sm:$0xff]
        %v289 = vld [vmem:[%s226 + $0x158] sm:$0xff]
        %v290 = vld [vmem:[%s226 + $0x160] sm:$0xff]
        %v291 = vld [vmem:[%s226 + $0x168] sm:$0xff]
        %v292 = vld [vmem:[%s226 + $0x170] sm:$0xff]
        %v293 = vld [vmem:[%s226 + $0x178] sm:$0xff]
        %v294 = vld [vmem:[%s226 + $0x180] sm:$0xff]
        %v295 = vld [vmem:[%s226 + $0x188] sm:$0xff]
        %v296 = vld [vmem:[%s226 + $0x190] sm:$0xff]
        %v297 = vld [vmem:[%s226 + $0x198] sm:$0xff]
        %v298 = vld [vmem:[%s226 + $0x1a0] sm:$0xff]
        %v299 = vld [vmem:[%s226 + $0x1a8] sm:$0xff]
        %v300 = vld [vmem:[%s226 + $0x1b0] sm:$0xff]
        %v301 = vld [vmem:[%s226 + $0x1b8] sm:$0xff]
        %v302 = vld [vmem:[%s226 + $0x1c0] sm:$0xff]
        %v303 = vld [vmem:[%s226 + $0x1c8] sm:$0xff]
        %v304 = vld [vmem:[%s226 + $0x1d0] sm:$0xff]
        %v305 = vld [vmem:[%s226 + $0x1d8] sm:$0xff]
        %v306 = vld [vmem:[%s226 + $0x1e0] sm:$0xff]
        %v307 = vld [vmem:[%s226 + $0x1e8] sm:$0xff]
        %v308 = vld [vmem:[%s226 + $0x1f0] sm:$0xff]
        %v309 = vld [vmem:[%s226 + $0x1f8] sm:$0xff]
        %v310 = vld [vmem:[%s236] sm:$0xf]
        %v311 = vld [vmem:[%s236 + $0x4] sm:$0xf]
        %v312 = vld [vmem:[%s236 + $0x8] sm:$0xf]
        %v313 = vld [vmem:[%s236 + $0xc] sm:$0xf]
        %v314 = vld [vmem:[%s236 + $0x10] sm:$0xf]
        %v315 = vld [vmem:[%s236 + $0x14] sm:$0xf]
        %v316 = vld [vmem:[%s236 + $0x18] sm:$0xf]
        %v317 = vld [vmem:[%s236 + $0x1c] sm:$0xf]
        %v318 = vld [vmem:[%s236 + $0x20] sm:$0xf]
        %v319 = vld [vmem:[%s236 + $0x24] sm:$0xf]
        %v320 = vld [vmem:[%s236 + $0x28] sm:$0xf]
        %v321 = vld [vmem:[%s236 + $0x2c] sm:$0xf]
        %v322 = vld [vmem:[%s236 + $0x30] sm:$0xf]
        %v323 = vld [vmem:[%s236 + $0x34] sm:$0xf]
        %v324 = vld [vmem:[%s236 + $0x38] sm:$0xf]
        %v325 = vld [vmem:[%s236 + $0x3c] sm:$0xf]
        %v326 = vld [vmem:[%s236 + $0x40] sm:$0xf]
        %v327 = vld [vmem:[%s236 + $0x44] sm:$0xf]
        %v328 = vld [vmem:[%s236 + $0x48] sm:$0x3]
        %v329 = vld [vmem:[%s239] sm:$0x1]
        %v331 = vperm.slane %v329, 0
        %v397 = vunpack.c.l.b16 %v246
        %v398 = vunpack.c.h.b16 %v246
        %v399 = vunpack.c.l.b16 %v247
        %v400 = vunpack.c.h.b16 %v247
        %v401 = vunpack.c.l.b16 %v248
        %v402 = vunpack.c.h.b16 %v248
        %v403 = vunpack.c.l.b16 %v249
        %v404 = vunpack.c.h.b16 %v249
        %v405 = vunpack.c.l.b16 %v250
        %v406 = vunpack.c.h.b16 %v250
        %v407 = vunpack.c.l.b16 %v251
        %v408 = vunpack.c.h.b16 %v251
        %v409 = vunpack.c.l.b16 %v252
        %v410 = vunpack.c.h.b16 %v252
        %v411 = vunpack.c.l.b16 %v253
        %v412 = vunpack.c.h.b16 %v253
        %v413 = vunpack.c.l.b16 %v254
        %v414 = vunpack.c.h.b16 %v254
        %v415 = vunpack.c.l.b16 %v255
        %v416 = vunpack.c.h.b16 %v255
        %v417 = vunpack.c.l.b16 %v256
        %v418 = vunpack.c.h.b16 %v256
        %v419 = vunpack.c.l.b16 %v257
        %v420 = vunpack.c.h.b16 %v257
        %v421 = vunpack.c.l.b16 %v258
        %v422 = vunpack.c.h.b16 %v258
        %v423 = vunpack.c.l.b16 %v259
        %v424 = vunpack.c.h.b16 %v259
        %v425 = vunpack.c.l.b16 %v260
        %v426 = vunpack.c.h.b16 %v260
        %v427 = vunpack.c.l.b16 %v261
        %v428 = vunpack.c.h.b16 %v261
        %v429 = vunpack.c.l.b16 %v262
        %v430 = vunpack.c.h.b16 %v262
        %v431 = vunpack.c.l.b16 %v263
        %v432 = vunpack.c.h.b16 %v263
        %v433 = vunpack.c.l.b16 %v264
        %v434 = vunpack.c.h.b16 %v264
        %v435 = vunpack.c.l.b16 %v265
        %v436 = vunpack.c.h.b16 %v265
        %v437 = vunpack.c.l.b16 %v266
        %v438 = vunpack.c.h.b16 %v266
        %v439 = vunpack.c.l.b16 %v267
        %v440 = vunpack.c.h.b16 %v267
        %v441 = vunpack.c.l.b16 %v268
        %v442 = vunpack.c.h.b16 %v268
        %v443 = vunpack.c.l.b16 %v269
        %v444 = vunpack.c.h.b16 %v269
        %v445 = vunpack.c.l.b16 %v270
        %v446 = vunpack.c.h.b16 %v270
        %v447 = vunpack.c.l.b16 %v271
        %v448 = vunpack.c.h.b16 %v271
        %v449 = vunpack.c.l.b16 %v272
        %v450 = vunpack.c.h.b16 %v272
        %v451 = vunpack.c.l.b16 %v273
        %v452 = vunpack.c.h.b16 %v273
        %v453 = vunpack.c.l.b16 %v274
        %v454 = vunpack.c.h.b16 %v274
        %v455 = vunpack.c.l.b16 %v275
        %v456 = vunpack.c.h.b16 %v275
        %v457 = vunpack.c.l.b16 %v276
        %v458 = vunpack.c.h.b16 %v276
        %v459 = vunpack.c.l.b16 %v277
        %v460 = vunpack.c.h.b16 %v277
        %v461 = vunpack.c.l.b16 %v278
        %v462 = vunpack.c.h.b16 %v278
        %v463 = vunpack.c.l.b16 %v279
        %v464 = vunpack.c.h.b16 %v279
        %v465 = vunpack.c.l.b16 %v280
        %v466 = vunpack.c.h.b16 %v280
        %v467 = vunpack.c.l.b16 %v281
        %v468 = vunpack.c.h.b16 %v281
        %v469 = vunpack.c.l.b16 %v282
        %v470 = vunpack.c.h.b16 %v282
        %v471 = vunpack.c.l.b16 %v283
        %v472 = vunpack.c.h.b16 %v283
        %v473 = vunpack.c.l.b16 %v284
        %v474 = vunpack.c.h.b16 %v284
        %v475 = vunpack.c.l.b16 %v285
        %v476 = vunpack.c.h.b16 %v285
        %v477 = vunpack.c.l.b16 %v286
        %v478 = vunpack.c.h.b16 %v286
        %v479 = vunpack.c.l.b16 %v287
        %v480 = vunpack.c.h.b16 %v287
        %v481 = vunpack.c.l.b16 %v288
        %v482 = vunpack.c.h.b16 %v288
        %v483 = vunpack.c.l.b16 %v289
        %v484 = vunpack.c.h.b16 %v289
        %v485 = vunpack.c.l.b16 %v290
        %v486 = vunpack.c.h.b16 %v290
        %v487 = vunpack.c.l.b16 %v291
        %v488 = vunpack.c.h.b16 %v291
        %v489 = vunpack.c.l.b16 %v292
        %v490 = vunpack.c.h.b16 %v292
        %v491 = vunpack.c.l.b16 %v293
        %v492 = vunpack.c.h.b16 %v293
        %v493 = vunpack.c.l.b16 %v294
        %v494 = vunpack.c.h.b16 %v294
        %v495 = vunpack.c.l.b16 %v295
        %v496 = vunpack.c.h.b16 %v295
        %v497 = vunpack.c.l.b16 %v296
        %v498 = vunpack.c.h.b16 %v296
        %v499 = vunpack.c.l.b16 %v297
        %v500 = vunpack.c.h.b16 %v297
        %v501 = vunpack.c.l.b16 %v298
        %v502 = vunpack.c.h.b16 %v298
        %v503 = vunpack.c.l.b16 %v299
        %v504 = vunpack.c.h.b16 %v299
        %v505 = vunpack.c.l.b16 %v300
        %v506 = vunpack.c.h.b16 %v300
        %v507 = vunpack.c.l.b16 %v301
        %v508 = vunpack.c.h.b16 %v301
        %v509 = vunpack.c.l.b16 %v302
        %v510 = vunpack.c.h.b16 %v302
        %v511 = vunpack.c.l.b16 %v303
        %v512 = vunpack.c.h.b16 %v303
        %v513 = vunpack.c.l.b16 %v304
        %v514 = vunpack.c.h.b16 %v304
        %v515 = vunpack.c.l.b16 %v305
        %v516 = vunpack.c.h.b16 %v305
        %v517 = vunpack.c.l.b16 %v306
        %v518 = vunpack.c.h.b16 %v306
        %v519 = vunpack.c.l.b16 %v307
        %v520 = vunpack.c.h.b16 %v307
        %v521 = vunpack.c.l.b16 %v308
        %v522 = vunpack.c.h.b16 %v308
        %v523 = vunpack.c.l.b16 %v309
        %v524 = vunpack.c.h.b16 %v309
        %v525 = vpack.c.b16 %v399, %v397
        %v526 = vpack.c.b16 %v400, %v398
        %v527 = vpack.c.b16 %v403, %v401
        %v528 = vpack.c.b16 %v404, %v402
        %v529 = vpack.c.b16 %v407, %v405
        %v530 = vpack.c.b16 %v408, %v406
        %v531 = vpack.c.b16 %v411, %v409
        %v532 = vpack.c.b16 %v412, %v410
        %v533 = vpack.c.b16 %v415, %v413
        %v534 = vpack.c.b16 %v416, %v414
        %v535 = vpack.c.b16 %v419, %v417
        %v536 = vpack.c.b16 %v420, %v418
        %v537 = vpack.c.b16 %v423, %v421
        %v538 = vpack.c.b16 %v424, %v422
        %v539 = vpack.c.b16 %v427, %v425
        %v540 = vpack.c.b16 %v428, %v426
        %v541 = vpack.c.b16 %v431, %v429
        %v542 = vpack.c.b16 %v432, %v430
        %v543 = vpack.c.b16 %v435, %v433
        %v544 = vpack.c.b16 %v436, %v434
        %v545 = vpack.c.b16 %v439, %v437
        %v546 = vpack.c.b16 %v440, %v438
        %v547 = vpack.c.b16 %v443, %v441
        %v548 = vpack.c.b16 %v444, %v442
        %v549 = vpack.c.b16 %v447, %v445
        %v550 = vpack.c.b16 %v448, %v446
        %v551 = vpack.c.b16 %v451, %v449
        %v552 = vpack.c.b16 %v452, %v450
        %v553 = vpack.c.b16 %v455, %v453
        %v554 = vpack.c.b16 %v456, %v454
        %v555 = vpack.c.b16 %v459, %v457
        %v556 = vpack.c.b16 %v460, %v458
        %v557 = vpack.c.b16 %v463, %v461
        %v558 = vpack.c.b16 %v464, %v462
        %v559 = vpack.c.b16 %v467, %v465
        %v560 = vpack.c.b16 %v468, %v466
        %v561 = vpack.c.b16 %v471, %v469
        %v562 = vpack.c.b16 %v472, %v470
        %v563 = vpack.c.b16 %v475, %v473
        %v564 = vpack.c.b16 %v476, %v474
        %v565 = vpack.c.b16 %v479, %v477
        %v566 = vpack.c.b16 %v480, %v478
        %v567 = vpack.c.b16 %v483, %v481
        %v568 = vpack.c.b16 %v484, %v482
        %v569 = vpack.c.b16 %v487, %v485
        %v570 = vpack.c.b16 %v488, %v486
        %v571 = vpack.c.b16 %v491, %v489
        %v572 = vpack.c.b16 %v492, %v490
        %v573 = vpack.c.b16 %v495, %v493
        %v574 = vpack.c.b16 %v496, %v494
        %v575 = vpack.c.b16 %v499, %v497
        %v576 = vpack.c.b16 %v500, %v498
        %v577 = vpack.c.b16 %v503, %v501
        %v578 = vpack.c.b16 %v504, %v502
        %v579 = vpack.c.b16 %v507, %v505
        %v580 = vpack.c.b16 %v508, %v506
        %v581 = vpack.c.b16 %v511, %v509
        %v582 = vpack.c.b16 %v512, %v510
        %v583 = vpack.c.b16 %v515, %v513
        %v584 = vpack.c.b16 %v516, %v514
        %v585 = vpack.c.b16 %v519, %v517
        %v586 = vpack.c.b16 %v520, %v518
        %v587 = vpack.c.b16 %v523, %v521
        %v588 = vpack.c.b16 %v524, %v522
        %v640 = vunpack.c.l.b16 %v310
        %v641 = vunpack.c.l.b16 %v311
        %v642 = vunpack.c.l.b16 %v312
        %v643 = vunpack.c.l.b16 %v313
        %v644 = vunpack.c.l.b16 %v314
        %v645 = vunpack.c.l.b16 %v315
        %v646 = vunpack.c.l.b16 %v316
        %v647 = vunpack.c.l.b16 %v317
        %v648 = vunpack.c.l.b16 %v318
        %v649 = vunpack.c.l.b16 %v319
        %v650 = vunpack.c.l.b16 %v320
        %v651 = vunpack.c.l.b16 %v321
        %v652 = vunpack.c.l.b16 %v322
        %v653 = vunpack.c.l.b16 %v323
        %v654 = vunpack.c.l.b16 %v324
        %v655 = vunpack.c.l.b16 %v325
        %v656 = vunpack.c.l.b16 %v326
        %v657 = vunpack.c.l.b16 %v327
        %v658 = vunpack.c.l.b16 %v328
        %v659 = vpack.c.b16 %v641, %v640
        %v660 = vpack.c.b16 %v643, %v642
        %v661 = vpack.c.b16 %v645, %v644
        %v662 = vpack.c.b16 %v647, %v646
        %v663 = vpack.c.b16 %v649, %v648
        %v664 = vpack.c.b16 %v651, %v650
        %v665 = vpack.c.b16 %v653, %v652
        %v666 = vpack.c.b16 %v655, %v654
        %v667 = vpack.c.b16 %v657, %v656
        %v668 = vpack.c.b16 %v658, %v658
        %vm678 = vcmask 154624
        %v680 = vsel %vm678, %v526, 0
        %v683 = vsel %vm678, %v528, 0
        %v686 = vsel %vm678, %v530, 0
        %v689 = vsel %vm678, %v532, 0
        %v692 = vsel %vm678, %v534, 0
        %v695 = vsel %vm678, %v536, 0
        %v698 = vsel %vm678, %v538, 0
        %v701 = vsel %vm678, %v540, 0
        %v704 = vsel %vm678, %v542, 0
        %v707 = vsel %vm678, %v544, 0
        %v710 = vsel %vm678, %v546, 0
        %v713 = vsel %vm678, %v548, 0
        %v716 = vsel %vm678, %v550, 0
        %v719 = vsel %vm678, %v552, 0
        %v722 = vsel %vm678, %v554, 0
        %v725 = vsel %vm678, %v556, 0
        %v728 = vsel %vm678, %v558, 0
        %v731 = vsel %vm678, %v560, 0
        %v734 = vsel %vm678, %v562, 0
        %v737 = vsel %vm678, %v564, 0
        %v740 = vsel %vm678, %v566, 0
        %v743 = vsel %vm678, %v568, 0
        %v746 = vsel %vm678, %v570, 0
        %v749 = vsel %vm678, %v572, 0
        %v752 = vsel %vm678, %v574, 0
        %v755 = vsel %vm678, %v576, 0
        %v758 = vsel %vm678, %v578, 0
        %v761 = vsel %vm678, %v580, 0
        %v764 = vsel %vm678, %v582, 0
        %v767 = vsel %vm678, %v584, 0
        %v770 = vsel %vm678, %v586, 0
        %v773 = vsel %vm678, %v588, 0
        %vm775 = vcmask 1040384
        %vm776 = vcmask 1041408
        %v777 = vsel %vm775, 4294967295, 65535
        %v778 = vsel %vm776, %v777, 0
        %v780 = vand.u32 %v668, %v778
        %782 = vmatpush.bf16.msra.mxu0 %v666
        %783 = vmatpush.bf16.msra.mxu0 %v665
        %784 = vmatpush.bf16.msra.mxu0 %v664
        %785 = vmatpush.bf16.msra.mxu0 %v663
        %786 = vmatpush.bf16.msra.mxu0 %v662
        %787 = vmatpush.bf16.msra.mxu0 %v661
        %788 = vmatpush.bf16.msra.mxu0 %v660
        %789 = vmatpush.bf16.msra.mxu0 %v659
        %790 = vmatmul.bf16.gmra.mxu0 %v525
        %v791 = vpop.f32.mrf.mxu0
        %v792 = vadd.f32 %v331, %v791
        %v793 = vpop.f32.mrf.mxu0
        %v794 = vadd.f32 %v331, %v793
        %795 = vmatmul.bf16.gmra.mxu0 %v527
        %v796 = vpop.f32.mrf.mxu0
        %v797 = vadd.f32 %v331, %v796
        %v798 = vpop.f32.mrf.mxu0
        %v799 = vadd.f32 %v331, %v798
        %800 = vmatmul.bf16.gmra.mxu0 %v529
        %v801 = vpop.f32.mrf.mxu0
        %v802 = vadd.f32 %v331, %v801
        %v803 = vpop.f32.mrf.mxu0
        %v804 = vadd.f32 %v331, %v803
        %805 = vmatmul.bf16.gmra.mxu0 %v531
        %v806 = vpop.f32.mrf.mxu0
        %v807 = vadd.f32 %v331, %v806
        %v808 = vpop.f32.mrf.mxu0
        %v809 = vadd.f32 %v331, %v808
        %810 = vmatmul.bf16.gmra.mxu0 %v533
        %v811 = vpop.f32.mrf.mxu0
        %v812 = vadd.f32 %v331, %v811
        %v813 = vpop.f32.mrf.mxu0
        %v814 = vadd.f32 %v331, %v813
        %815 = vmatmul.bf16.gmra.mxu0 %v535
        %v816 = vpop.f32.mrf.mxu0
        %v817 = vadd.f32 %v331, %v816
        %v818 = vpop.f32.mrf.mxu0
        %v819 = vadd.f32 %v331, %v818
        %820 = vmatmul.bf16.gmra.mxu0 %v537
        %v821 = vpop.f32.mrf.mxu0
        %v822 = vadd.f32 %v331, %v821
        %v823 = vpop.f32.mrf.mxu0
        %v824 = vadd.f32 %v331, %v823
        %825 = vmatmul.bf16.gmra.mxu0 %v539
        %v826 = vpop.f32.mrf.mxu0
        %v827 = vadd.f32 %v331, %v826
        %v828 = vpop.f32.mrf.mxu0
        %v829 = vadd.f32 %v331, %v828
        %830 = vmatmul.bf16.gmra.mxu0 %v541
        %v831 = vpop.f32.mrf.mxu0
        %v832 = vadd.f32 %v331, %v831
        %v833 = vpop.f32.mrf.mxu0
        %v834 = vadd.f32 %v331, %v833
        %835 = vmatmul.bf16.gmra.mxu0 %v543
        %v836 = vpop.f32.mrf.mxu0
        %v837 = vadd.f32 %v331, %v836
        %v838 = vpop.f32.mrf.mxu0
        %v839 = vadd.f32 %v331, %v838
        %840 = vmatmul.bf16.gmra.mxu0 %v545
        %v841 = vpop.f32.mrf.mxu0
        %v842 = vadd.f32 %v331, %v841
        %v843 = vpop.f32.mrf.mxu0
        %v844 = vadd.f32 %v331, %v843
        %845 = vmatmul.bf16.gmra.mxu0 %v547
        %v846 = vpop.f32.mrf.mxu0
        %v847 = vadd.f32 %v331, %v846
        %v848 = vpop.f32.mrf.mxu0
        %v849 = vadd.f32 %v331, %v848
        %850 = vmatmul.bf16.gmra.mxu0 %v549
        %v851 = vpop.f32.mrf.mxu0
        %v852 = vadd.f32 %v331, %v851
        %v853 = vpop.f32.mrf.mxu0
        %v854 = vadd.f32 %v331, %v853
        %855 = vmatmul.bf16.gmra.mxu0 %v551
        %v856 = vpop.f32.mrf.mxu0
        %v857 = vadd.f32 %v331, %v856
        %v858 = vpop.f32.mrf.mxu0
        %v859 = vadd.f32 %v331, %v858
        %860 = vmatmul.bf16.gmra.mxu0 %v553
        %v861 = vpop.f32.mrf.mxu0
        %v862 = vadd.f32 %v331, %v861
        %v863 = vpop.f32.mrf.mxu0
        %v864 = vadd.f32 %v331, %v863
        %865 = vmatmul.bf16.gmra.mxu0 %v555
        %v866 = vpop.f32.mrf.mxu0
        %v867 = vadd.f32 %v331, %v866
        %v868 = vpop.f32.mrf.mxu0
        %v869 = vadd.f32 %v331, %v868
        %870 = vmatmul.bf16.gmra.mxu0 %v557
        %v871 = vpop.f32.mrf.mxu0
        %v872 = vadd.f32 %v331, %v871
        %v873 = vpop.f32.mrf.mxu0
        %v874 = vadd.f32 %v331, %v873
        %875 = vmatmul.bf16.gmra.mxu0 %v559
        %v876 = vpop.f32.mrf.mxu0
        %v877 = vadd.f32 %v331, %v876
        %v878 = vpop.f32.mrf.mxu0
        %v879 = vadd.f32 %v331, %v878
        %880 = vmatmul.bf16.gmra.mxu0 %v561
        %v881 = vpop.f32.mrf.mxu0
        %v882 = vadd.f32 %v331, %v881
        %v883 = vpop.f32.mrf.mxu0
        %v884 = vadd.f32 %v331, %v883
        %885 = vmatmul.bf16.gmra.mxu0 %v563
        %v886 = vpop.f32.mrf.mxu0
        %v887 = vadd.f32 %v331, %v886
        %v888 = vpop.f32.mrf.mxu0
        %v889 = vadd.f32 %v331, %v888
        %890 = vmatmul.bf16.gmra.mxu0 %v565
        %v891 = vpop.f32.mrf.mxu0
        %v892 = vadd.f32 %v331, %v891
        %v893 = vpop.f32.mrf.mxu0
        %v894 = vadd.f32 %v331, %v893
        %895 = vmatmul.bf16.gmra.mxu0 %v567
        %v896 = vpop.f32.mrf.mxu0
        %v897 = vadd.f32 %v331, %v896
        %v898 = vpop.f32.mrf.mxu0
        %v899 = vadd.f32 %v331, %v898
        %900 = vmatmul.bf16.gmra.mxu0 %v569
        %v901 = vpop.f32.mrf.mxu0
        %v902 = vadd.f32 %v331, %v901
        %v903 = vpop.f32.mrf.mxu0
        %v904 = vadd.f32 %v331, %v903
        %905 = vmatmul.bf16.gmra.mxu0 %v571
        %v906 = vpop.f32.mrf.mxu0
        %v907 = vadd.f32 %v331, %v906
        %v908 = vpop.f32.mrf.mxu0
        %v909 = vadd.f32 %v331, %v908
        %910 = vmatmul.bf16.gmra.mxu0 %v573
        %v911 = vpop.f32.mrf.mxu0
        %v912 = vadd.f32 %v331, %v911
        %v913 = vpop.f32.mrf.mxu0
        %v914 = vadd.f32 %v331, %v913
        %915 = vmatmul.bf16.gmra.mxu0 %v575
        %v916 = vpop.f32.mrf.mxu0
        %v917 = vadd.f32 %v331, %v916
        %v918 = vpop.f32.mrf.mxu0
        %v919 = vadd.f32 %v331, %v918
        %920 = vmatmul.bf16.gmra.mxu0 %v577
        %v921 = vpop.f32.mrf.mxu0
        %v922 = vadd.f32 %v331, %v921
        %v923 = vpop.f32.mrf.mxu0
        %v924 = vadd.f32 %v331, %v923
        %925 = vmatmul.bf16.gmra.mxu0 %v579
        %v926 = vpop.f32.mrf.mxu0
        %v927 = vadd.f32 %v331, %v926
        %v928 = vpop.f32.mrf.mxu0
        %v929 = vadd.f32 %v331, %v928
        %930 = vmatmul.bf16.gmra.mxu0 %v581
        %v931 = vpop.f32.mrf.mxu0
        %v932 = vadd.f32 %v331, %v931
        %v933 = vpop.f32.mrf.mxu0
        %v934 = vadd.f32 %v331, %v933
        %935 = vmatmul.bf16.gmra.mxu0 %v583
        %v936 = vpop.f32.mrf.mxu0
        %v937 = vadd.f32 %v331, %v936
        %v938 = vpop.f32.mrf.mxu0
        %v939 = vadd.f32 %v331, %v938
        %940 = vmatmul.bf16.gmra.mxu0 %v585
        %v941 = vpop.f32.mrf.mxu0
        %v942 = vadd.f32 %v331, %v941
        %v943 = vpop.f32.mrf.mxu0
        %v944 = vadd.f32 %v331, %v943
        %945 = vmatmul.bf16.gmra.mxu0 %v587
        %v946 = vpop.f32.mrf.mxu0
        %v947 = vadd.f32 %v331, %v946
        %v948 = vpop.f32.mrf.mxu0
        %v949 = vadd.f32 %v331, %v948
        %950 = vdwg.mxu0
        %951 = vmatpush.bf16.msra.mxu0 0
        %952 = vmatpush.bf16.msra.mxu0 0
        %953 = vmatpush.bf16.msra.mxu0 0
        %954 = vmatpush.bf16.msra.mxu0 0
        %955 = vmatpush.bf16.msra.mxu0 0
        %956 = vmatpush.bf16.msra.mxu0 0
        %957 = vmatpush.bf16.msra.mxu0 %v780
        %958 = vmatpush.bf16.msra.mxu0 %v667
        %959 = vmatmul.bf16.gmra.mxu0 %v680
        %v960 = vpop.f32.mrf.mxu0
        %v961 = vadd.f32 %v792, %v960
        %v962 = vpop.f32.mrf.mxu0
        %v963 = vadd.f32 %v794, %v962
        %964 = vmatmul.bf16.gmra.mxu0 %v683
        %v965 = vpop.f32.mrf.mxu0
        %v966 = vadd.f32 %v797, %v965
        %v967 = vpop.f32.mrf.mxu0
        %v968 = vadd.f32 %v799, %v967
        %969 = vmatmul.bf16.gmra.mxu0 %v686
        %v970 = vpop.f32.mrf.mxu0
        %v971 = vadd.f32 %v802, %v970
        %v972 = vpop.f32.mrf.mxu0
        %v973 = vadd.f32 %v804, %v972
        %974 = vmatmul.bf16.gmra.mxu0 %v689
        %v975 = vpop.f32.mrf.mxu0
        %v976 = vadd.f32 %v807, %v975
        %v977 = vpop.f32.mrf.mxu0
        %v978 = vadd.f32 %v809, %v977
        %979 = vmatmul.bf16.gmra.mxu0 %v692
        %v980 = vpop.f32.mrf.mxu0
        %v981 = vadd.f32 %v812, %v980
        %v982 = vpop.f32.mrf.mxu0
        %v983 = vadd.f32 %v814, %v982
        %984 = vmatmul.bf16.gmra.mxu0 %v695
        %v985 = vpop.f32.mrf.mxu0
        %v986 = vadd.f32 %v817, %v985
        %v987 = vpop.f32.mrf.mxu0
        %v988 = vadd.f32 %v819, %v987
        %989 = vmatmul.bf16.gmra.mxu0 %v698
        %v990 = vpop.f32.mrf.mxu0
        %v991 = vadd.f32 %v822, %v990
        %v992 = vpop.f32.mrf.mxu0
        %v993 = vadd.f32 %v824, %v992
        %994 = vmatmul.bf16.gmra.mxu0 %v701
        %v995 = vpop.f32.mrf.mxu0
        %v996 = vadd.f32 %v827, %v995
        %v997 = vpop.f32.mrf.mxu0
        %v998 = vadd.f32 %v829, %v997
        %999 = vmatmul.bf16.gmra.mxu0 %v704
        %v1000 = vpop.f32.mrf.mxu0
        %v1001 = vadd.f32 %v832, %v1000
        %v1002 = vpop.f32.mrf.mxu0
        %v1003 = vadd.f32 %v834, %v1002
        %1004 = vmatmul.bf16.gmra.mxu0 %v707
        %v1005 = vpop.f32.mrf.mxu0
        %v1006 = vadd.f32 %v837, %v1005
        %v1007 = vpop.f32.mrf.mxu0
        %v1008 = vadd.f32 %v839, %v1007
        %1009 = vmatmul.bf16.gmra.mxu0 %v710
        %v1010 = vpop.f32.mrf.mxu0
        %v1011 = vadd.f32 %v842, %v1010
        %v1012 = vpop.f32.mrf.mxu0
        %v1013 = vadd.f32 %v844, %v1012
        %1014 = vmatmul.bf16.gmra.mxu0 %v713
        %v1015 = vpop.f32.mrf.mxu0
        %v1016 = vadd.f32 %v847, %v1015
        %v1017 = vpop.f32.mrf.mxu0
        %v1018 = vadd.f32 %v849, %v1017
        %1019 = vmatmul.bf16.gmra.mxu0 %v716
        %v1020 = vpop.f32.mrf.mxu0
        %v1021 = vadd.f32 %v852, %v1020
        %v1022 = vpop.f32.mrf.mxu0
        %v1023 = vadd.f32 %v854, %v1022
        %1024 = vmatmul.bf16.gmra.mxu0 %v719
        %v1025 = vpop.f32.mrf.mxu0
        %v1026 = vadd.f32 %v857, %v1025
        %v1027 = vpop.f32.mrf.mxu0
        %v1028 = vadd.f32 %v859, %v1027
        %1029 = vmatmul.bf16.gmra.mxu0 %v722
        %v1030 = vpop.f32.mrf.mxu0
        %v1031 = vadd.f32 %v862, %v1030
        %v1032 = vpop.f32.mrf.mxu0
        %v1033 = vadd.f32 %v864, %v1032
        %1034 = vmatmul.bf16.gmra.mxu0 %v725
        %v1035 = vpop.f32.mrf.mxu0
        %v1036 = vadd.f32 %v867, %v1035
        %v1037 = vpop.f32.mrf.mxu0
        %v1038 = vadd.f32 %v869, %v1037
        %1039 = vmatmul.bf16.gmra.mxu0 %v728
        %v1040 = vpop.f32.mrf.mxu0
        %v1041 = vadd.f32 %v872, %v1040
        %v1042 = vpop.f32.mrf.mxu0
        %v1043 = vadd.f32 %v874, %v1042
        %1044 = vmatmul.bf16.gmra.mxu0 %v731
        %v1045 = vpop.f32.mrf.mxu0
        %v1046 = vadd.f32 %v877, %v1045
        %v1047 = vpop.f32.mrf.mxu0
        %v1048 = vadd.f32 %v879, %v1047
        %1049 = vmatmul.bf16.gmra.mxu0 %v734
        %v1050 = vpop.f32.mrf.mxu0
        %v1051 = vadd.f32 %v882, %v1050
        %v1052 = vpop.f32.mrf.mxu0
        %v1053 = vadd.f32 %v884, %v1052
        %1054 = vmatmul.bf16.gmra.mxu0 %v737
        %v1055 = vpop.f32.mrf.mxu0
        %v1056 = vadd.f32 %v887, %v1055
        %v1057 = vpop.f32.mrf.mxu0
        %v1058 = vadd.f32 %v889, %v1057
        %1059 = vmatmul.bf16.gmra.mxu0 %v740
        %v1060 = vpop.f32.mrf.mxu0
        %v1061 = vadd.f32 %v892, %v1060
        %v1062 = vpop.f32.mrf.mxu0
        %v1063 = vadd.f32 %v894, %v1062
        %1064 = vmatmul.bf16.gmra.mxu0 %v743
        %v1065 = vpop.f32.mrf.mxu0
        %v1066 = vadd.f32 %v897, %v1065
        %v1067 = vpop.f32.mrf.mxu0
        %v1068 = vadd.f32 %v899, %v1067
        %1069 = vmatmul.bf16.gmra.mxu0 %v746
        %v1070 = vpop.f32.mrf.mxu0
        %v1071 = vadd.f32 %v902, %v1070
        %v1072 = vpop.f32.mrf.mxu0
        %v1073 = vadd.f32 %v904, %v1072
        %1074 = vmatmul.bf16.gmra.mxu0 %v749
        %v1075 = vpop.f32.mrf.mxu0
        %v1076 = vadd.f32 %v907, %v1075
        %v1077 = vpop.f32.mrf.mxu0
        %v1078 = vadd.f32 %v909, %v1077
        %1079 = vmatmul.bf16.gmra.mxu0 %v752
        %v1080 = vpop.f32.mrf.mxu0
        %v1081 = vadd.f32 %v912, %v1080
        %v1082 = vpop.f32.mrf.mxu0
        %v1083 = vadd.f32 %v914, %v1082
        %1084 = vmatmul.bf16.gmra.mxu0 %v755
        %v1085 = vpop.f32.mrf.mxu0
        %v1086 = vadd.f32 %v917, %v1085
        %v1087 = vpop.f32.mrf.mxu0
        %v1088 = vadd.f32 %v919, %v1087
        %1089 = vmatmul.bf16.gmra.mxu0 %v758
        %v1090 = vpop.f32.mrf.mxu0
        %v1091 = vadd.f32 %v922, %v1090
        %v1092 = vpop.f32.mrf.mxu0
        %v1093 = vadd.f32 %v924, %v1092
        %1094 = vmatmul.bf16.gmra.mxu0 %v761
        %v1095 = vpop.f32.mrf.mxu0
        %v1096 = vadd.f32 %v927, %v1095
        %v1097 = vpop.f32.mrf.mxu0
        %v1098 = vadd.f32 %v929, %v1097
        %1099 = vmatmul.bf16.gmra.mxu0 %v764
        %v1100 = vpop.f32.mrf.mxu0
        %v1101 = vadd.f32 %v932, %v1100
        %v1102 = vpop.f32.mrf.mxu0
        %v1103 = vadd.f32 %v934, %v1102
        %1104 = vmatmul.bf16.gmra.mxu0 %v767
        %v1105 = vpop.f32.mrf.mxu0
        %v1106 = vadd.f32 %v937, %v1105
        %v1107 = vpop.f32.mrf.mxu0
        %v1108 = vadd.f32 %v939, %v1107
        %1109 = vmatmul.bf16.gmra.mxu0 %v770
        %v1110 = vpop.f32.mrf.mxu0
        %v1111 = vadd.f32 %v942, %v1110
        %v1112 = vpop.f32.mrf.mxu0
        %v1113 = vadd.f32 %v944, %v1112
        %1114 = vmatmul.bf16.gmra.mxu0 %v773
        %v1115 = vpop.f32.mrf.mxu0
        %v1116 = vadd.f32 %v947, %v1115
        %v1117 = vpop.f32.mrf.mxu0
        %v1118 = vadd.f32 %v949, %v1117
        %1119 = vdwg.mxu0
        %v1120 = vmax.f32 %v961, 0.0
        %v1121 = vmax.f32 %v963, 0.0
        %v1122 = vmax.f32 %v966, 0.0
        %v1123 = vmax.f32 %v968, 0.0
        %v1124 = vmax.f32 %v971, 0.0
        %v1125 = vmax.f32 %v973, 0.0
        %v1126 = vmax.f32 %v976, 0.0
        %v1127 = vmax.f32 %v978, 0.0
        %v1128 = vmax.f32 %v981, 0.0
        %v1129 = vmax.f32 %v983, 0.0
        %v1130 = vmax.f32 %v986, 0.0
        %v1131 = vmax.f32 %v988, 0.0
        %v1132 = vmax.f32 %v991, 0.0
        %v1133 = vmax.f32 %v993, 0.0
        %v1134 = vmax.f32 %v996, 0.0
        %v1135 = vmax.f32 %v998, 0.0
        %v1136 = vmax.f32 %v1001, 0.0
        %v1137 = vmax.f32 %v1003, 0.0
        %v1138 = vmax.f32 %v1006, 0.0
        %v1139 = vmax.f32 %v1008, 0.0
        %v1140 = vmax.f32 %v1011, 0.0
        %v1141 = vmax.f32 %v1013, 0.0
        %v1142 = vmax.f32 %v1016, 0.0
        %v1143 = vmax.f32 %v1018, 0.0
        %v1144 = vmax.f32 %v1021, 0.0
        %v1145 = vmax.f32 %v1023, 0.0
        %v1146 = vmax.f32 %v1026, 0.0
        %v1147 = vmax.f32 %v1028, 0.0
        %v1148 = vmax.f32 %v1031, 0.0
        %v1149 = vmax.f32 %v1033, 0.0
        %v1150 = vmax.f32 %v1036, 0.0
        %v1151 = vmax.f32 %v1038, 0.0
        %v1152 = vmax.f32 %v1041, 0.0
        %v1153 = vmax.f32 %v1043, 0.0
        %v1154 = vmax.f32 %v1046, 0.0
        %v1155 = vmax.f32 %v1048, 0.0
        %v1156 = vmax.f32 %v1051, 0.0
        %v1157 = vmax.f32 %v1053, 0.0
        %v1158 = vmax.f32 %v1056, 0.0
        %v1159 = vmax.f32 %v1058, 0.0
        %v1160 = vmax.f32 %v1061, 0.0
        %v1161 = vmax.f32 %v1063, 0.0
        %v1162 = vmax.f32 %v1066, 0.0
        %v1163 = vmax.f32 %v1068, 0.0
        %v1164 = vmax.f32 %v1071, 0.0
        %v1165 = vmax.f32 %v1073, 0.0
        %v1166 = vmax.f32 %v1076, 0.0
        %v1167 = vmax.f32 %v1078, 0.0
        %v1168 = vmax.f32 %v1081, 0.0
        %v1169 = vmax.f32 %v1083, 0.0
        %v1170 = vmax.f32 %v1086, 0.0
        %v1171 = vmax.f32 %v1088, 0.0
        %v1172 = vmax.f32 %v1091, 0.0
        %v1173 = vmax.f32 %v1093, 0.0
        %v1174 = vmax.f32 %v1096, 0.0
        %v1175 = vmax.f32 %v1098, 0.0
        %v1176 = vmax.f32 %v1101, 0.0
        %v1177 = vmax.f32 %v1103, 0.0
        %v1178 = vmax.f32 %v1106, 0.0
        %v1179 = vmax.f32 %v1108, 0.0
        %v1180 = vmax.f32 %v1111, 0.0
        %v1181 = vmax.f32 %v1113, 0.0
        %v1182 = vmax.f32 %v1116, 0.0
        %v1183 = vmax.f32 %v1118, 0.0
        %v1184 = vpack.c.bf16 %v1120, %v1120
        %v1185 = vpack.c.bf16 %v1121, %v1121
        %v1186 = vpack.c.bf16 %v1122, %v1122
        %v1187 = vpack.c.bf16 %v1123, %v1123
        %v1188 = vpack.c.bf16 %v1124, %v1124
        %v1189 = vpack.c.bf16 %v1125, %v1125
        %v1190 = vpack.c.bf16 %v1126, %v1126
        %v1191 = vpack.c.bf16 %v1127, %v1127
        %v1192 = vpack.c.bf16 %v1128, %v1128
        %v1193 = vpack.c.bf16 %v1129, %v1129
        %v1194 = vpack.c.bf16 %v1130, %v1130
        %v1195 = vpack.c.bf16 %v1131, %v1131
        %v1196 = vpack.c.bf16 %v1132, %v1132
        %v1197 = vpack.c.bf16 %v1133, %v1133
        %v1198 = vpack.c.bf16 %v1134, %v1134
        %v1199 = vpack.c.bf16 %v1135, %v1135
        %v1200 = vpack.c.bf16 %v1136, %v1136
        %v1201 = vpack.c.bf16 %v1137, %v1137
        %v1202 = vpack.c.bf16 %v1138, %v1138
        %v1203 = vpack.c.bf16 %v1139, %v1139
        %v1204 = vpack.c.bf16 %v1140, %v1140
        %v1205 = vpack.c.bf16 %v1141, %v1141
        %v1206 = vpack.c.bf16 %v1142, %v1142
        %v1207 = vpack.c.bf16 %v1143, %v1143
        %v1208 = vpack.c.bf16 %v1144, %v1144
        %v1209 = vpack.c.bf16 %v1145, %v1145
        %v1210 = vpack.c.bf16 %v1146, %v1146
        %v1211 = vpack.c.bf16 %v1147, %v1147
        %v1212 = vpack.c.bf16 %v1148, %v1148
        %v1213 = vpack.c.bf16 %v1149, %v1149
        %v1214 = vpack.c.bf16 %v1150, %v1150
        %v1215 = vpack.c.bf16 %v1151, %v1151
        %v1216 = vpack.c.bf16 %v1152, %v1152
        %v1217 = vpack.c.bf16 %v1153, %v1153
        %v1218 = vpack.c.bf16 %v1154, %v1154
        %v1219 = vpack.c.bf16 %v1155, %v1155
        %v1220 = vpack.c.bf16 %v1156, %v1156
        %v1221 = vpack.c.bf16 %v1157, %v1157
        %v1222 = vpack.c.bf16 %v1158, %v1158
        %v1223 = vpack.c.bf16 %v1159, %v1159
        %v1224 = vpack.c.bf16 %v1160, %v1160
        %v1225 = vpack.c.bf16 %v1161, %v1161
        %v1226 = vpack.c.bf16 %v1162, %v1162
        %v1227 = vpack.c.bf16 %v1163, %v1163
        %v1228 = vpack.c.bf16 %v1164, %v1164
        %v1229 = vpack.c.bf16 %v1165, %v1165
        %v1230 = vpack.c.bf16 %v1166, %v1166
        %v1231 = vpack.c.bf16 %v1167, %v1167
        %v1232 = vpack.c.bf16 %v1168, %v1168
        %v1233 = vpack.c.bf16 %v1169, %v1169
        %v1234 = vpack.c.bf16 %v1170, %v1170
        %v1235 = vpack.c.bf16 %v1171, %v1171
        %v1236 = vpack.c.bf16 %v1172, %v1172
        %v1237 = vpack.c.bf16 %v1173, %v1173
        %v1238 = vpack.c.bf16 %v1174, %v1174
        %v1239 = vpack.c.bf16 %v1175, %v1175
        %v1240 = vpack.c.bf16 %v1176, %v1176
        %v1241 = vpack.c.bf16 %v1177, %v1177
        %v1242 = vpack.c.bf16 %v1178, %v1178
        %v1243 = vpack.c.bf16 %v1179, %v1179
        %v1244 = vpack.c.bf16 %v1180, %v1180
        %v1245 = vpack.c.bf16 %v1181, %v1181
        %v1246 = vpack.c.bf16 %v1182, %v1182
        %v1247 = vpack.c.bf16 %v1183, %v1183
        %vm1248 = vcmask 519168
        %1249 = vst.msk [vmem:[%s215] sm:$0xf] %vm1248, %v1184
        %1250 = vst.msk [vmem:[%s215 + $0x4] sm:$0xf] %vm1248, %v1185
        %1251 = vst.msk [vmem:[%s215 + $0x8] sm:$0xf] %vm1248, %v1186
        %1252 = vst.msk [vmem:[%s215 + $0xc] sm:$0xf] %vm1248, %v1187
        %1253 = vst.msk [vmem:[%s215 + $0x10] sm:$0xf] %vm1248, %v1188
        %1254 = vst.msk [vmem:[%s215 + $0x14] sm:$0xf] %vm1248, %v1189
        %1255 = vst.msk [vmem:[%s215 + $0x18] sm:$0xf] %vm1248, %v1190
        %1256 = vst.msk [vmem:[%s215 + $0x1c] sm:$0xf] %vm1248, %v1191
        %1257 = vst.msk [vmem:[%s215 + $0x20] sm:$0xf] %vm1248, %v1192
        %1258 = vst.msk [vmem:[%s215 + $0x24] sm:$0xf] %vm1248, %v1193
        %1259 = vst.msk [vmem:[%s215 + $0x28] sm:$0xf] %vm1248, %v1194
        %1260 = vst.msk [vmem:[%s215 + $0x2c] sm:$0xf] %vm1248, %v1195
        %1261 = vst.msk [vmem:[%s215 + $0x30] sm:$0xf] %vm1248, %v1196
        %1262 = vst.msk [vmem:[%s215 + $0x34] sm:$0xf] %vm1248, %v1197
        %1263 = vst.msk [vmem:[%s215 + $0x38] sm:$0xf] %vm1248, %v1198
        %1264 = vst.msk [vmem:[%s215 + $0x3c] sm:$0xf] %vm1248, %v1199
        %1265 = vst.msk [vmem:[%s215 + $0x40] sm:$0xf] %vm1248, %v1200
        %1266 = vst.msk [vmem:[%s215 + $0x44] sm:$0xf] %vm1248, %v1201
        %1267 = vst.msk [vmem:[%s215 + $0x48] sm:$0xf] %vm1248, %v1202
        %1268 = vst.msk [vmem:[%s215 + $0x4c] sm:$0xf] %vm1248, %v1203
        %1269 = vst.msk [vmem:[%s215 + $0x50] sm:$0xf] %vm1248, %v1204
        %1270 = vst.msk [vmem:[%s215 + $0x54] sm:$0xf] %vm1248, %v1205
        %1271 = vst.msk [vmem:[%s215 + $0x58] sm:$0xf] %vm1248, %v1206
        %1272 = vst.msk [vmem:[%s215 + $0x5c] sm:$0xf] %vm1248, %v1207
        %1273 = vst.msk [vmem:[%s215 + $0x60] sm:$0xf] %vm1248, %v1208
        %1274 = vst.msk [vmem:[%s215 + $0x64] sm:$0xf] %vm1248, %v1209
        %1275 = vst.msk [vmem:[%s215 + $0x68] sm:$0xf] %vm1248, %v1210
        %1276 = vst.msk [vmem:[%s215 + $0x6c] sm:$0xf] %vm1248, %v1211
        %1277 = vst.msk [vmem:[%s215 + $0x70] sm:$0xf] %vm1248, %v1212
        %1278 = vst.msk [vmem:[%s215 + $0x74] sm:$0xf] %vm1248, %v1213
        %1279 = vst.msk [vmem:[%s215 + $0x78] sm:$0xf] %vm1248, %v1214
        %1280 = vst.msk [vmem:[%s215 + $0x7c] sm:$0xf] %vm1248, %v1215
        %1281 = vst.msk [vmem:[%s215 + $0x80] sm:$0xf] %vm1248, %v1216
        %1282 = vst.msk [vmem:[%s215 + $0x84] sm:$0xf] %vm1248, %v1217
        %1283 = vst.msk [vmem:[%s215 + $0x88] sm:$0xf] %vm1248, %v1218
        %1284 = vst.msk [vmem:[%s215 + $0x8c] sm:$0xf] %vm1248, %v1219
        %1285 = vst.msk [vmem:[%s215 + $0x90] sm:$0xf] %vm1248, %v1220
        %1286 = vst.msk [vmem:[%s215 + $0x94] sm:$0xf] %vm1248, %v1221
        %1287 = vst.msk [vmem:[%s215 + $0x98] sm:$0xf] %vm1248, %v1222
        %1288 = vst.msk [vmem:[%s215 + $0x9c] sm:$0xf] %vm1248, %v1223
        %1289 = vst.msk [vmem:[%s215 + $0xa0] sm:$0xf] %vm1248, %v1224
        %1290 = vst.msk [vmem:[%s215 + $0xa4] sm:$0xf] %vm1248, %v1225
        %1291 = vst.msk [vmem:[%s215 + $0xa8] sm:$0xf] %vm1248, %v1226
        %1292 = vst.msk [vmem:[%s215 + $0xac] sm:$0xf] %vm1248, %v1227
        %1293 = vst.msk [vmem:[%s215 + $0xb0] sm:$0xf] %vm1248, %v1228
        %1294 = vst.msk [vmem:[%s215 + $0xb4] sm:$0xf] %vm1248, %v1229
        %1295 = vst.msk [vmem:[%s215 + $0xb8] sm:$0xf] %vm1248, %v1230
        %1296 = vst.msk [vmem:[%s215 + $0xbc] sm:$0xf] %vm1248, %v1231
        %1297 = vst.msk [vmem:[%s215 + $0xc0] sm:$0xf] %vm1248, %v1232
        %1298 = vst.msk [vmem:[%s215 + $0xc4] sm:$0xf] %vm1248, %v1233
        %1299 = vst.msk [vmem:[%s215 + $0xc8] sm:$0xf] %vm1248, %v1234
        %1300 = vst.msk [vmem:[%s215 + $0xcc] sm:$0xf] %vm1248, %v1235
        %1301 = vst.msk [vmem:[%s215 + $0xd0] sm:$0xf] %vm1248, %v1236
        %1302 = vst.msk [vmem:[%s215 + $0xd4] sm:$0xf] %vm1248, %v1237
        %1303 = vst.msk [vmem:[%s215 + $0xd8] sm:$0xf] %vm1248, %v1238
        %1304 = vst.msk [vmem:[%s215 + $0xdc] sm:$0xf] %vm1248, %v1239
        %1305 = vst.msk [vmem:[%s215 + $0xe0] sm:$0xf] %vm1248, %v1240
        %1306 = vst.msk [vmem:[%s215 + $0xe4] sm:$0xf] %vm1248, %v1241
        %1307 = vst.msk [vmem:[%s215 + $0xe8] sm:$0xf] %vm1248, %v1242
        %1308 = vst.msk [vmem:[%s215 + $0xec] sm:$0xf] %vm1248, %v1243
        %1309 = vst.msk [vmem:[%s215 + $0xf0] sm:$0xf] %vm1248, %v1244
        %1310 = vst.msk [vmem:[%s215 + $0xf4] sm:$0xf] %vm1248, %v1245
        %1311 = vst.msk [vmem:[%s215 + $0xf8] sm:$0xf] %vm1248, %v1246
        %1312 = vst.msk [vmem:[%s215 + $0xfc] sm:$0xf] %vm1248, %v1247
        %s1313 = sand.u32 %s114, 1
        %s1314 = sand.u32 %s114, 1
        %s1315 = smul.addr %s1314, 256
        %s1316 = scalar_lea.vmem [#allocation2], %s1315
        // Predicated region
        $region33: #{conv_bn.1} parent=31 // pred_check
          %p1317 = pneg %p124
        $region34: #{conv_bn.1} parent=31 // pred_check_branch
          %1319 = sbr.rel (%p1317) target = $region36
        $region35: #{conv_bn.1} parent=31 // pred_region
          %s1320 = smul.u32 64, %s19
          %s1321 = ssub.s32 3721, %s1320
          %p1322 = scmp.lt.s32.totalorder %s1321, 64
          %s1323 = scalar_select %p1322, %s1321, 64
          %s1324 = smul.u32 4, %s1323
          %p1325 = scmp.ne.s32.totalorder 0, %s1324
          %s1326 = sadd.s32 %s18, %s1320
          %s1327 = smul.addr %s1326, 4
          %s1328 = scalar_lea.vmem %s3, %s1327
          // Predicated region
          $region37: #{conv_bn.1} parent=35 // pred_check
            %p1329 = pneg %p1325
          $region38: #{conv_bn.1} parent=35 // pred_check_branch
            %1331 = sbr.rel (%p1329) target = $region40
          $region39: #{conv_bn.1} parent=35 // pred_region
            // Predicated region
            $region41: #{conv_bn.1} parent=39 // pred_check
              _
            $region42: #{conv_bn.1} parent=39 // pred_check_branch
              %1333 = sbr.rel target = $region44
            $region43: #{conv_bn.1} parent=39 // pred_region
              // Predicated region
              $region63: #{conv_bn.1} parent=43 // pred_check
                _
              $region64: #{conv_bn.1} parent=43 // pred_check_branch
                %1445 = sbr.rel (0) target = $region66
              $region65: #{conv_bn.1} parent=43 // pred_region
                %s1447 = ssub.s32 16, 1
                %s1448 = sshrl.u32 %s1323, 5
                // While loop
                $region67: #{conv_bn.1} parent=65 // loop_pre_header
                  _
                $region68: #{conv_bn.1} parent=65 // loop_header
                  %s1450 = sphi 0, %s1452
                  %p1451 = scmp.ge.s32.totalorder %s1450, %s1448
                  %s1455 = sphi 0, %s1524
                  %s1456 = sphi %s1316, %s1527
                  %s1457 = sphi %s1328, %s1528
                $region69: #{conv_bn.1} parent=65 // loop_header_branch
                  %1454 = sbr.rel (%p1451) target = $region73
                $region70: #{conv_bn.1} parent=65 // loop_body
                  %v1458 = vld [vmem:[%s1456] sm:%s1447]
                  %1459 = vst [vmem:[%s1457] sm:%s1447] %v1458
                  %v1460 = vld [vmem:[%s1456 + $0x4] sm:%s1447]
                  %1461 = vst [vmem:[%s1457 + $0x4] sm:%s1447] %v1460
                  %v1462 = vld [vmem:[%s1456 + $0x8] sm:%s1447]
                  %1463 = vst [vmem:[%s1457 + $0x8] sm:%s1447] %v1462
                  %v1464 = vld [vmem:[%s1456 + $0xc] sm:%s1447]
                  %1465 = vst [vmem:[%s1457 + $0xc] sm:%s1447] %v1464
                  %v1466 = vld [vmem:[%s1456 + $0x10] sm:%s1447]
                  %1467 = vst [vmem:[%s1457 + $0x10] sm:%s1447] %v1466
                  %v1468 = vld [vmem:[%s1456 + $0x14] sm:%s1447]
                  %1469 = vst [vmem:[%s1457 + $0x14] sm:%s1447] %v1468
                  %v1470 = vld [vmem:[%s1456 + $0x18] sm:%s1447]
                  %1471 = vst [vmem:[%s1457 + $0x18] sm:%s1447] %v1470
                  %v1472 = vld [vmem:[%s1456 + $0x1c] sm:%s1447]
                  %1473 = vst [vmem:[%s1457 + $0x1c] sm:%s1447] %v1472
                  %v1474 = vld [vmem:[%s1456 + $0x20] sm:%s1447]
                  %1475 = vst [vmem:[%s1457 + $0x20] sm:%s1447] %v1474
                  %v1476 = vld [vmem:[%s1456 + $0x24] sm:%s1447]
                  %1477 = vst [vmem:[%s1457 + $0x24] sm:%s1447] %v1476
                  %v1478 = vld [vmem:[%s1456 + $0x28] sm:%s1447]
                  %1479 = vst [vmem:[%s1457 + $0x28] sm:%s1447] %v1478
                  %v1480 = vld [vmem:[%s1456 + $0x2c] sm:%s1447]
                  %1481 = vst [vmem:[%s1457 + $0x2c] sm:%s1447] %v1480
                  %v1482 = vld [vmem:[%s1456 + $0x30] sm:%s1447]
                  %1483 = vst [vmem:[%s1457 + $0x30] sm:%s1447] %v1482
                  %v1484 = vld [vmem:[%s1456 + $0x34] sm:%s1447]
                  %1485 = vst [vmem:[%s1457 + $0x34] sm:%s1447] %v1484
                  %v1486 = vld [vmem:[%s1456 + $0x38] sm:%s1447]
                  %1487 = vst [vmem:[%s1457 + $0x38] sm:%s1447] %v1486
                  %v1488 = vld [vmem:[%s1456 + $0x3c] sm:%s1447]
                  %1489 = vst [vmem:[%s1457 + $0x3c] sm:%s1447] %v1488
                  %v1490 = vld [vmem:[%s1456 + $0x40] sm:%s1447]
                  %1491 = vst [vmem:[%s1457 + $0x40] sm:%s1447] %v1490
                  %v1492 = vld [vmem:[%s1456 + $0x44] sm:%s1447]
                  %1493 = vst [vmem:[%s1457 + $0x44] sm:%s1447] %v1492
                  %v1494 = vld [vmem:[%s1456 + $0x48] sm:%s1447]
                  %1495 = vst [vmem:[%s1457 + $0x48] sm:%s1447] %v1494
                  %v1496 = vld [vmem:[%s1456 + $0x4c] sm:%s1447]
                  %1497 = vst [vmem:[%s1457 + $0x4c] sm:%s1447] %v1496
                  %v1498 = vld [vmem:[%s1456 + $0x50] sm:%s1447]
                  %1499 = vst [vmem:[%s1457 + $0x50] sm:%s1447] %v1498
                  %v1500 = vld [vmem:[%s1456 + $0x54] sm:%s1447]
                  %1501 = vst [vmem:[%s1457 + $0x54] sm:%s1447] %v1500
                  %v1502 = vld [vmem:[%s1456 + $0x58] sm:%s1447]
                  %1503 = vst [vmem:[%s1457 + $0x58] sm:%s1447] %v1502
                  %v1504 = vld [vmem:[%s1456 + $0x5c] sm:%s1447]
                  %1505 = vst [vmem:[%s1457 + $0x5c] sm:%s1447] %v1504
                  %v1506 = vld [vmem:[%s1456 + $0x60] sm:%s1447]
                  %1507 = vst [vmem:[%s1457 + $0x60] sm:%s1447] %v1506
                  %v1508 = vld [vmem:[%s1456 + $0x64] sm:%s1447]
                  %1509 = vst [vmem:[%s1457 + $0x64] sm:%s1447] %v1508
                  %v1510 = vld [vmem:[%s1456 + $0x68] sm:%s1447]
                  %1511 = vst [vmem:[%s1457 + $0x68] sm:%s1447] %v1510
                  %v1512 = vld [vmem:[%s1456 + $0x6c] sm:%s1447]
                  %1513 = vst [vmem:[%s1457 + $0x6c] sm:%s1447] %v1512
                  %v1514 = vld [vmem:[%s1456 + $0x70] sm:%s1447]
                  %1515 = vst [vmem:[%s1457 + $0x70] sm:%s1447] %v1514
                  %v1516 = vld [vmem:[%s1456 + $0x74] sm:%s1447]
                  %1517 = vst [vmem:[%s1457 + $0x74] sm:%s1447] %v1516
                  %v1518 = vld [vmem:[%s1456 + $0x78] sm:%s1447]
                  %1519 = vst [vmem:[%s1457 + $0x78] sm:%s1447] %v1518
                  %v1520 = vld [vmem:[%s1456 + $0x7c] sm:%s1447]
                  %1521 = vst [vmem:[%s1457 + $0x7c] sm:%s1447] %v1520
                  %s1522 = sadd.s32 1, %s1455
                  %p1523 = scmp.ge.s32.totalorder %s1522, %s1448
                  %s1524 = scalar_select %p1523, 0, %s1522
                  %s1525 = smul.u32 %s1524, 128
                  %s1526 = smul.u32 %s1524, 128
                  %s1527 = scalar_lea.vmem %s1316, %s1525 [#allocation2]
                  %s1528 = scalar_lea.vmem %s1328, %s1526
                $region71: #{conv_bn.1} parent=65 // loop_footer
                  %s1452 = sadd.s32 %s1450, 1
                $region72: #{conv_bn.1} parent=65 // loop_footer_branch
                  %1449 = sbr.rel target = $region68
                $region73: #{conv_bn.1} parent=65 // loop_exit
                  _
                %s1529 = sshrl.u32 %s1323, 5
                %s1530 = sand.u32 %s1323, 31
                %s1531 = smul.u32 %s1529, 32
                %s1532 = smul.u32 4, %s1531
                %s1533 = scalar_lea.vmem %s1316, %s1532 [#allocation2]
                %s1534 = smul.u32 4, %s1531
                %s1535 = scalar_lea.vmem %s1328, %s1534
                // While loop
                $region74: #{conv_bn.1} parent=65 // loop_pre_header
                  _
                $region75: #{conv_bn.1} parent=65 // loop_header
                  %s1537 = sphi 0, %s1539
                  %p1538 = scmp.ge.s32.totalorder %s1537, %s1530
                  %s1542 = sphi 0, %s1549
                  %s1543 = sphi %s1533, %s1552
                  %s1544 = sphi %s1535, %s1553
                $region76: #{conv_bn.1} parent=65 // loop_header_branch
                  %1541 = sbr.rel (%p1538) target = $region80
                $region77: #{conv_bn.1} parent=65 // loop_body
                  %v1545 = vld [vmem:[%s1543] sm:%s1447]
                  %1546 = vst [vmem:[%s1544] sm:%s1447] %v1545
                  %s1547 = sadd.s32 1, %s1542
                  %p1548 = scmp.ge.s32.totalorder %s1547, %s1530
                  %s1549 = scalar_select %p1548, 0, %s1547
                  %s1550 = smul.u32 %s1549, 4
                  %s1551 = smul.u32 %s1549, 4
                  %s1552 = scalar_lea.vmem %s1533, %s1550 [#allocation2]
                  %s1553 = scalar_lea.vmem %s1535, %s1551
                $region78: #{conv_bn.1} parent=65 // loop_footer
                  %s1539 = sadd.s32 %s1537, 1
                $region79: #{conv_bn.1} parent=65 // loop_footer_branch
                  %1536 = sbr.rel target = $region75
                $region80: #{conv_bn.1} parent=65 // loop_exit
                  _
              $region66: #{conv_bn.1} parent=43 // pred_fallthru
                _
            $region44: #{conv_bn.1} parent=39 // pred_fallthru
              _
            // Predicated region
            $region45: #{conv_bn.1} parent=39 // pred_check
              _
            $region46: #{conv_bn.1} parent=39 // pred_check_branch
              %1335 = sbr.rel (0) target = $region48
            $region47: #{conv_bn.1} parent=39 // pred_region
              %s1337 = ssub.s32 16, 1
              %s1338 = sshrl.u32 %s1323, 5
              // While loop
              $region49: #{conv_bn.1} parent=47 // loop_pre_header
                _
              $region50: #{conv_bn.1} parent=47 // loop_header
                %s1340 = sphi 0, %s1342
                %p1341 = scmp.ge.s32.totalorder %s1340, %s1338
                %s1345 = sphi 0, %s1414
                %s1346 = sphi %s1316, %s1417
                %s1347 = sphi %s1328, %s1418
              $region51: #{conv_bn.1} parent=47 // loop_header_branch
                %1344 = sbr.rel (%p1341) target = $region55
              $region52: #{conv_bn.1} parent=47 // loop_body
                %v1348 = vld [vmem:[%s1346] sm:%s1337]
                %1349 = vst [vmem:[%s1347] sm:%s1337] %v1348
                %v1350 = vld [vmem:[%s1346 + $0x4] sm:%s1337]
                %1351 = vst [vmem:[%s1347 + $0x4] sm:%s1337] %v1350
                %v1352 = vld [vmem:[%s1346 + $0x8] sm:%s1337]
                %1353 = vst [vmem:[%s1347 + $0x8] sm:%s1337] %v1352
                %v1354 = vld [vmem:[%s1346 + $0xc] sm:%s1337]
                %1355 = vst [vmem:[%s1347 + $0xc] sm:%s1337] %v1354
                %v1356 = vld [vmem:[%s1346 + $0x10] sm:%s1337]
                %1357 = vst [vmem:[%s1347 + $0x10] sm:%s1337] %v1356
                %v1358 = vld [vmem:[%s1346 + $0x14] sm:%s1337]
                %1359 = vst [vmem:[%s1347 + $0x14] sm:%s1337] %v1358
                %v1360 = vld [vmem:[%s1346 + $0x18] sm:%s1337]
                %1361 = vst [vmem:[%s1347 + $0x18] sm:%s1337] %v1360
                %v1362 = vld [vmem:[%s1346 + $0x1c] sm:%s1337]
                %1363 = vst [vmem:[%s1347 + $0x1c] sm:%s1337] %v1362
                %v1364 = vld [vmem:[%s1346 + $0x20] sm:%s1337]
                %1365 = vst [vmem:[%s1347 + $0x20] sm:%s1337] %v1364
                %v1366 = vld [vmem:[%s1346 + $0x24] sm:%s1337]
                %1367 = vst [vmem:[%s1347 + $0x24] sm:%s1337] %v1366
                %v1368 = vld [vmem:[%s1346 + $0x28] sm:%s1337]
                %1369 = vst [vmem:[%s1347 + $0x28] sm:%s1337] %v1368
                %v1370 = vld [vmem:[%s1346 + $0x2c] sm:%s1337]
                %1371 = vst [vmem:[%s1347 + $0x2c] sm:%s1337] %v1370
                %v1372 = vld [vmem:[%s1346 + $0x30] sm:%s1337]
                %1373 = vst [vmem:[%s1347 + $0x30] sm:%s1337] %v1372
                %v1374 = vld [vmem:[%s1346 + $0x34] sm:%s1337]
                %1375 = vst [vmem:[%s1347 + $0x34] sm:%s1337] %v1374
                %v1376 = vld [vmem:[%s1346 + $0x38] sm:%s1337]
                %1377 = vst [vmem:[%s1347 + $0x38] sm:%s1337] %v1376
                %v1378 = vld [vmem:[%s1346 + $0x3c] sm:%s1337]
                %1379 = vst [vmem:[%s1347 + $0x3c] sm:%s1337] %v1378
                %v1380 = vld [vmem:[%s1346 + $0x40] sm:%s1337]
                %1381 = vst [vmem:[%s1347 + $0x40] sm:%s1337] %v1380
                %v1382 = vld [vmem:[%s1346 + $0x44] sm:%s1337]
                %1383 = vst [vmem:[%s1347 + $0x44] sm:%s1337] %v1382
                %v1384 = vld [vmem:[%s1346 + $0x48] sm:%s1337]
                %1385 = vst [vmem:[%s1347 + $0x48] sm:%s1337] %v1384
                %v1386 = vld [vmem:[%s1346 + $0x4c] sm:%s1337]
                %1387 = vst [vmem:[%s1347 + $0x4c] sm:%s1337] %v1386
                %v1388 = vld [vmem:[%s1346 + $0x50] sm:%s1337]
                %1389 = vst [vmem:[%s1347 + $0x50] sm:%s1337] %v1388
                %v1390 = vld [vmem:[%s1346 + $0x54] sm:%s1337]
                %1391 = vst [vmem:[%s1347 + $0x54] sm:%s1337] %v1390
                %v1392 = vld [vmem:[%s1346 + $0x58] sm:%s1337]
                %1393 = vst [vmem:[%s1347 + $0x58] sm:%s1337] %v1392
                %v1394 = vld [vmem:[%s1346 + $0x5c] sm:%s1337]
                %1395 = vst [vmem:[%s1347 + $0x5c] sm:%s1337] %v1394
                %v1396 = vld [vmem:[%s1346 + $0x60] sm:%s1337]
                %1397 = vst [vmem:[%s1347 + $0x60] sm:%s1337] %v1396
                %v1398 = vld [vmem:[%s1346 + $0x64] sm:%s1337]
                %1399 = vst [vmem:[%s1347 + $0x64] sm:%s1337] %v1398
                %v1400 = vld [vmem:[%s1346 + $0x68] sm:%s1337]
                %1401 = vst [vmem:[%s1347 + $0x68] sm:%s1337] %v1400
                %v1402 = vld [vmem:[%s1346 + $0x6c] sm:%s1337]
                %1403 = vst [vmem:[%s1347 + $0x6c] sm:%s1337] %v1402
                %v1404 = vld [vmem:[%s1346 + $0x70] sm:%s1337]
                %1405 = vst [vmem:[%s1347 + $0x70] sm:%s1337] %v1404
                %v1406 = vld [vmem:[%s1346 + $0x74] sm:%s1337]
                %1407 = vst [vmem:[%s1347 + $0x74] sm:%s1337] %v1406
                %v1408 = vld [vmem:[%s1346 + $0x78] sm:%s1337]
                %1409 = vst [vmem:[%s1347 + $0x78] sm:%s1337] %v1408
                %v1410 = vld [vmem:[%s1346 + $0x7c] sm:%s1337]
                %1411 = vst [vmem:[%s1347 + $0x7c] sm:%s1337] %v1410
                %s1412 = sadd.s32 1, %s1345
                %p1413 = scmp.ge.s32.totalorder %s1412, %s1338
                %s1414 = scalar_select %p1413, 0, %s1412
                %s1415 = smul.u32 %s1414, 128
                %s1416 = smul.u32 %s1414, 128
                %s1417 = scalar_lea.vmem %s1316, %s1415 [#allocation2]
                %s1418 = scalar_lea.vmem %s1328, %s1416
              $region53: #{conv_bn.1} parent=47 // loop_footer
                %s1342 = sadd.s32 %s1340, 1
              $region54: #{conv_bn.1} parent=47 // loop_footer_branch
                %1339 = sbr.rel target = $region50
              $region55: #{conv_bn.1} parent=47 // loop_exit
                _
              %s1419 = sshrl.u32 %s1323, 5
              %s1420 = sand.u32 %s1323, 31
              %s1421 = smul.u32 %s1419, 32
              %s1422 = smul.u32 4, %s1421
              %s1423 = scalar_lea.vmem %s1316, %s1422 [#allocation2]
              %s1424 = smul.u32 4, %s1421
              %s1425 = scalar_lea.vmem %s1328, %s1424
              // While loop
              $region56: #{conv_bn.1} parent=47 // loop_pre_header
                _
              $region57: #{conv_bn.1} parent=47 // loop_header
                %s1427 = sphi 0, %s1429
                %p1428 = scmp.ge.s32.totalorder %s1427, %s1420
                %s1432 = sphi 0, %s1439
                %s1433 = sphi %s1423, %s1442
                %s1434 = sphi %s1425, %s1443
              $region58: #{conv_bn.1} parent=47 // loop_header_branch
                %1431 = sbr.rel (%p1428) target = $region62
              $region59: #{conv_bn.1} parent=47 // loop_body
                %v1435 = vld [vmem:[%s1433] sm:%s1337]
                %1436 = vst [vmem:[%s1434] sm:%s1337] %v1435
                %s1437 = sadd.s32 1, %s1432
                %p1438 = scmp.ge.s32.totalorder %s1437, %s1420
                %s1439 = scalar_select %p1438, 0, %s1437
                %s1440 = smul.u32 %s1439, 4
                %s1441 = smul.u32 %s1439, 4
                %s1442 = scalar_lea.vmem %s1423, %s1440 [#allocation2]
                %s1443 = scalar_lea.vmem %s1425, %s1441
              $region60: #{conv_bn.1} parent=47 // loop_footer
                %s1429 = sadd.s32 %s1427, 1
              $region61: #{conv_bn.1} parent=47 // loop_footer_branch
                %1426 = sbr.rel target = $region57
              $region62: #{conv_bn.1} parent=47 // loop_exit
                _
            $region48: #{conv_bn.1} parent=39 // pred_fallthru
              _
          $region40: #{conv_bn.1} parent=35 // pred_fallthru
            _
          %1554 = vnop
        $region36: #{conv_bn.1} parent=31 // pred_fallthru
          _
      $region32: #{conv_bn.1} parent=5 // pred_fallthru
        _
      %p1555 = scmp.le.s32.totalorder 2, %s9
      // Predicated region
      $region81: #{conv_bn.1} parent=5 // pred_check
        %p1556 = pneg %p1555
      $region82: #{conv_bn.1} parent=5 // pred_check_branch
        %1558 = sbr.rel (%p1556) target = $region84
      $region83: #{conv_bn.1} parent=5 // pred_region
        %s1559 = ssub.s32 %s9, 2
        // Predicated region
        $region85: #{conv_bn.1} parent=83 // pred_check
          %p1560 = pneg %p130
        $region86: #{conv_bn.1} parent=83 // pred_check_branch
          %1562 = sbr.rel (%p1560) target = $region88
        $region87: #{conv_bn.1} parent=83 // pred_region
          %s1563 = sand.u32 %s115, 1
          %s1564 = sand.u32 %s115, 1
          %s1565 = smul.addr %s1564, 256
          %s1566 = scalar_lea.vmem [#allocation2], %s1565
        $region88: #{conv_bn.1} parent=83 // pred_fallthru
          _
      $region84: #{conv_bn.1} parent=5 // pred_fallthru
        _
    $region6: #{conv_bn.1} parent=1 // loop_footer
      %s13 = sadd.s32 1, %s9
    $region7: #{conv_bn.1} parent=1 // loop_footer_branch
      %8 = sbr.rel target = $region3
    $region8: #{conv_bn.1} parent=1 // loop_exit
      _

</llo_original>
